<compile_context>
chip_gen: v5e
topology: v5e:2x2
jax: 0.10.0
libtpu: 0.0.40
codegen_flags: <defaults>
</compile_context>

<pallas_src>
import numpy as np
import jax
import jax.numpy as jnp
from jax.experimental import pallas as pl
from jax.experimental.pallas import tpu as pltpu


# ---------------------------------------------------------------------------
# Fused kernel body
# ---------------------------------------------------------------------------
def _fused_kernel(cls_ids_ref,                       # SMEM (B,) int32, 1-indexed
                  feat_ref,                          # (1, tile, C)      bf16
                  proto_ref,                         # (ncls, C)         bf16
                  ws1_ref,                           # (hid_s, tile)     bf16
                  bs1_ref,                           # (ncls*hid_s, 1)   f32
                  ws2b_ref,                          # (ncls*ntok, ncls*hid_s) bf16 (block-diag)
                  bs2_ref,                           # (ncls*ntok, 1)    f32
                  w1_ref,                            # (hid_d, C)        bf16
                  b1_ref,                            # (hid_d, 1)        f32
                  w2_ref,                            # (C, hid_d)        bf16
                  b2_ref,                            # (C, 1)            f32
                  dense_ref,                         # (1, C, tile)      f32
                  sparse_ref,                        # (1, ncls*ntok, C) f32
                  hs_acc):                           # VMEM (ncls*hid_s, C) f32
    b = pl.program_id(0)
    hw = pl.program_id(1)
    n_hw = pl.num_programs(1)

    f_b = feat_ref[0]                                # (tile, C) bf16
    protos = proto_ref[...]                          # (ncls, C) bf16
    ncls = protos.shape[0]
    hid_s, tile = ws1_ref.shape

    # similarity in both orientations: contract-last-dim dots (q @ k^T pattern),
    # no in-kernel transposes, f32 accumulation.
    sim = jax.lax.dot_general(f_b, protos, (((1,), (1,)), ((), ())),
                              preferred_element_type=jnp.float32)    # (tile, ncls)
    simT = jax.lax.dot_general(protos, f_b, (((1,), (1,)), ((), ())),
                               preferred_element_type=jnp.float32)   # (ncls, tile)

    # ---------------- sparse branch: partial hs for ALL classes ----------------
    @pl.when(hw == 0)
    def _():
        hs_acc[...] = jnp.zeros_like(hs_acc)

    # ws1 @ (f * (1+sim_k))  ==  (ws1 * (1+sim_k)^T) @ f ; stack all classes'
    # scaled ws1 rows so a SINGLE MXU dot produces every class's partial hs.
    w1s = ws1_ref[...].astype(jnp.float32)                           # (hid_s, tile) f32
    scaled = (1.0 + simT)[:, None, :] * w1s[None, :, :]              # (ncls, hid_s, tile)
    scaled_b = scaled.reshape(ncls * hid_s, tile).astype(jnp.bfloat16)
    hs_acc[...] += jnp.dot(scaled_b, f_b,
                           preferred_element_type=jnp.float32)       # (ncls*hid_s, C)

    @pl.when(hw == n_hw - 1)
    def _():
        hs = jnp.maximum(hs_acc[...] + bs1_ref[...], 0.0)            # (ncls*hid_s, C)
        ss = jnp.dot(ws2b_ref[...], hs.astype(jnp.bfloat16),
                     preferred_element_type=jnp.float32) + bs2_ref[...]
        sparse_ref[0] = ss                                           # (ncls*ntok, C)

    # ------------- dense branch: selected class only, transposed (C, tile) -----
    cls = cls_ids_ref[b] - 1          # 1-indexed -> 0-indexed (OOB => sim_sel = 0)
    col = jax.lax.broadcasted_iota(jnp.int32, sim.shape, 1)
    sim_sel = jnp.sum(jnp.where(col == cls, sim, 0.0),
                      axis=-1, keepdims=True)                        # (tile, 1)
    fm_sel = f_b.astype(jnp.float32) * (1.0 + sim_sel)               # (tile, C) f32
    hdT = jax.lax.dot_general(w1_ref[...], fm_sel.astype(jnp.bfloat16),
                              (((1,), (1,)), ((), ())),
                              preferred_element_type=jnp.float32)    # (hid_d, tile)
    hdT = jnp.maximum(hdT + b1_ref[...], 0.0)
    denseT = jnp.dot(w2_ref[...], hdT.astype(jnp.bfloat16),
                     preferred_element_type=jnp.float32) + b2_ref[...]   # (C, tile)
    dense_ref[0] = denseT.astype(dense_ref.dtype)


def _pick_hw_tile(HW, requested=None):
    if requested is not None:
        assert HW % requested == 0 and (requested % 128 == 0 or requested == HW)
        return requested
    if HW % 128 != 0:
        return HW
    for t in (512, 384, 256, 128):           # <= 512 rows: fits v7x 64 MiB comfortably
        if HW % t == 0:
            return t
    return HW


# ---------------------------------------------------------------------------
# Wrapper reproducing Prototype_Prompt_Encoder.forward
# ---------------------------------------------------------------------------
def prototype_prompt_encoder(feat, prototypes, cls_ids, num_classes, params, size,
                             hw_tile=None):
    B, HW, C = feat.shape
    num_cls = prototypes.shape[0]
    hid_s = params["ws1"].shape[0]
    ntok = params["ws2"].shape[0]
    hid_d = params["w1"].shape[0]
    assert HW == size * size
    assert num_cls == num_classes
    # PyTorch module's pn-embedding broadcast (num_cls=1 rearrange) only works
    # for batch==1; keep that contract explicit.
    assert B == 1

    hw_tile = _pick_hw_tile(HW, hw_tile)
    n_hw = HW // hw_tile

    bf16, f32 = jnp.bfloat16, jnp.float32
    feat_b = feat.astype(bf16)
    proto_b = prototypes.astype(bf16)
    ws1_b = params["ws1"].astype(bf16)
    w1_b = params["w1"].astype(bf16)
    w2_b = params["w2"].astype(bf16)
    # pack the per-class second sparse conv into ONE block-diagonal dot
    ws2_blk = jnp.kron(jnp.eye(num_cls, dtype=f32), params["ws2"].astype(f32)).astype(bf16)
    bs1_rep = jnp.tile(params["bs1"].astype(f32), num_cls).reshape(num_cls * hid_s, 1)
    bs2_rep = jnp.tile(params["bs2"].astype(f32), num_cls).reshape(num_cls * ntok, 1)
    b1_col = params["b1"].astype(f32).reshape(hid_d, 1)
    b2_col = params["b2"].astype(f32).reshape(C, 1)

    grid_spec = pltpu.PrefetchScalarGridSpec(
        num_scalar_prefetch=1,                                   # cls_ids -> SMEM
        grid=(B, n_hw),
        in_specs=[
            pl.BlockSpec((1, hw_tile, C), lambda b, h, cids: (b, h, 0)),      # feat tile
            pl.BlockSpec((num_cls, C), lambda b, h, cids: (0, 0)),            # prototypes
            pl.BlockSpec((hid_s, hw_tile), lambda b, h, cids: (0, h)),        # ws1 tile
            pl.BlockSpec((num_cls * hid_s, 1), lambda b, h, cids: (0, 0)),    # bs1 (rep)
            pl.BlockSpec((num_cls * ntok, num_cls * hid_s),
                         lambda b, h, cids: (0, 0)),                          # ws2 blkdiag
            pl.BlockSpec((num_cls * ntok, 1), lambda b, h, cids: (0, 0)),     # bs2 (rep)
            pl.BlockSpec((hid_d, C), lambda b, h, cids: (0, 0)),              # w1
            pl.BlockSpec((hid_d, 1), lambda b, h, cids: (0, 0)),              # b1
            pl.BlockSpec((C, hid_d), lambda b, h, cids: (0, 0)),              # w2
            pl.BlockSpec((C, 1), lambda b, h, cids: (0, 0)),                  # b2
        ],
        out_specs=(
            pl.BlockSpec((1, C, hw_tile), lambda b, h, cids: (b, 0, h)),          # dense (B,C,HW)
            pl.BlockSpec((1, num_cls * ntok, C), lambda b, h, cids: (b, 0, 0)),   # sparse slab
        ),
        scratch_shapes=[pltpu.VMEM((num_cls * hid_s, C), jnp.float32)],       # hs accumulator
    )

    dense_nc_hw, sparse_slab = pl.pallas_call(
        _fused_kernel,
        out_shape=(
            jax.ShapeDtypeStruct((B, C, HW), jnp.float32),
            jax.ShapeDtypeStruct((B, num_cls * ntok, C), jnp.float32),
        ),
        grid_spec=grid_spec,
        compiler_params=pltpu.CompilerParams(
            dimension_semantics=("parallel", "arbitrary"),   # HW is a reduction axis
            vmem_limit_bytes=32 * 1024 * 1024),
    )(cls_ids.astype(jnp.int32), feat_b, proto_b, ws1_b, bs1_rep,
      ws2_blk, bs2_rep, w1_b, b1_col, w2_b, b2_col)

    # dense: kernel already produced channel-major (B, C, HW) -> NCHW is a free reshape
    dense_embeddings = dense_nc_hw.reshape(B, C, size, size)

    # sparse: (B, ncls*ntok, C) -> (B*ncls, 1, ntok, C), then the PyTorch-style
    # pos/neg class-embedding broadcast add (batch==1 semantics of the module)
    sparse_pre = sparse_slab.reshape(B * num_cls, 1, ntok, C)
    one_hot = jax.nn.one_hot(cls_ids - 1, num_classes, dtype=jnp.float32)
    pos = params["emb_pos"][None, None] * one_hot[:, :, None, None]
    neg = params["emb_neg"][None, None] * (1.0 - one_hot)[:, :, None, None]
    sparse_embeddings = sparse_pre + pos + neg
    return dense_embeddings, sparse_embeddings.reshape(sparse_embeddings.shape[0], -1, C)


# ---------------------------------------------------------------------------
# Pure-JAX reference (mirrors the PyTorch forward) for correctness check
# ---------------------------------------------------------------------------
def reference(feat, prototypes, cls_ids, num_classes, params, size):
    B, HW, C = feat.shape
    ncls = prototypes.shape[0]
    ntok = params["ws2"].shape[0]
    featb = jnp.broadcast_to(feat[:, None], (B, ncls, HW, C))
    sim = jnp.einsum("bkhc,kc->bkh", featb, prototypes)[..., None]
    featm = featb + featb * sim
    one_hot = jax.nn.one_hot(cls_ids - 1, num_classes, dtype=feat.dtype)
    feat_sel = featm[jnp.arange(B), cls_ids - 1]
    x = feat_sel.reshape(B, size, size, C).transpose(0, 3, 1, 2)   # NCHW
    h = jnp.einsum("oc,bchw->bohw", params["w1"], x) + params["b1"][None, :, None, None]
    h = jnp.maximum(h, 0.0)
    dense = jnp.einsum("oc,bchw->bohw", params["w2"], h) + params["b2"][None, :, None, None]
    fs = featm.reshape(B * ncls, HW, C)
    hs = jnp.einsum("jh,nhc->njc", params["ws1"], fs) + params["bs1"][None, :, None]
    hs = jnp.maximum(hs, 0.0)
    ss = jnp.einsum("tj,njc->ntc", params["ws2"], hs) + params["bs2"][None, :, None]
    ss = ss.reshape(B * ncls, 1, ntok, C)
    pos = params["emb_pos"][None, None] * one_hot[:, :, None, None]
    neg = params["emb_neg"][None, None] * (1.0 - one_hot)[:, :, None, None]
    se = ss + pos + neg
    return dense, se.reshape(se.shape[0], -1, C)


if __name__ == "__main__":
    # Small shapes consistent with the module (feat_dim scaled down, size=16 so
    # HW=256 and hw_tile=128 exercises the multi-tile hs accumulation path).
    feat_dim, hid_d, hid_s = 128, 32, 32
    size, num_tokens = 16, 8
    num_classes = 4
    B, HW = 1, size * size

    key = jax.random.PRNGKey(0)
    ks = jax.random.split(key, 12)

    def bf16_round(x):          # make matmul operands exactly bf16-representable
        return x.astype(jnp.bfloat16).astype(jnp.float32)

    params = {
        "w1": bf16_round(jax.random.normal(ks[0], (hid_d, feat_dim), jnp.float32) * 0.05),   # dense_fc_1
        "b1": jax.random.normal(ks[1], (hid_d,), jnp.float32) * 0.05,
        "w2": bf16_round(jax.random.normal(ks[2], (feat_dim, hid_d), jnp.float32) * 0.05),   # dense_fc_2
        "b2": jax.random.normal(ks[3], (feat_dim,), jnp.float32) * 0.05,
        "ws1": bf16_round(jax.random.normal(ks[4], (hid_s, HW), jnp.float32) * 0.05),        # sparse_fc_1
        "bs1": jax.random.normal(ks[5], (hid_s,), jnp.float32) * 0.05,
        "ws2": bf16_round(jax.random.normal(ks[6], (num_tokens, hid_s), jnp.float32) * 0.05),  # sparse_fc_2
        "bs2": jax.random.normal(ks[7], (num_tokens,), jnp.float32) * 0.05,
        "emb_neg": jax.random.normal(ks[8], (num_tokens, feat_dim), jnp.float32) * 0.1,
        "emb_pos": jax.random.normal(ks[9], (num_tokens, feat_dim), jnp.float32) * 0.1,
    }

    feat = bf16_round(jax.random.normal(ks[10], (B, HW, feat_dim), jnp.float32) * 0.5)
    prototypes = bf16_round(jax.random.normal(ks[11], (num_classes, feat_dim), jnp.float32) * 0.1)
    cls_ids = jnp.array([2] * B, dtype=jnp.int32)   # 1-indexed class ids

    dense_out, sparse_out = prototype_prompt_encoder(
        feat, prototypes, cls_ids, num_classes, params, size, hw_tile=128)
    jax.block_until_ready((dense_out, sparse_out))

    dense_ref, sparse_ref = reference(
        feat, prototypes, cls_ids, num_classes, params, size)
    np.testing.assert_allclose(np.asarray(dense_out), np.asarray(dense_ref),
                               rtol=1e-2, atol=5e-3)
    np.testing.assert_allclose(np.asarray(sparse_out), np.asarray(sparse_ref),
                               rtol=1e-2, atol=5e-3)

    print("KERNEL_OK")
</pallas_src>

<mosaic_0001>
module attributes {stable_mosaic.version = 11 : i64} {
  func.func @_fused_kernel(%arg0: i32, %arg1: i32, %arg2: memref<1xi32, #tpu.memory_space<smem>>, %arg3: memref<1x128x128xbf16, #tpu.memory_space<vmem>>, %arg4: memref<4x128xbf16, #tpu.memory_space<vmem>>, %arg5: memref<32x128xbf16, #tpu.memory_space<vmem>>, %arg6: memref<128x1xf32, #tpu.memory_space<vmem>>, %arg7: memref<32x128xbf16, #tpu.memory_space<vmem>>, %arg8: memref<32x1xf32, #tpu.memory_space<vmem>>, %arg9: memref<32x128xbf16, #tpu.memory_space<vmem>>, %arg10: memref<32x1xf32, #tpu.memory_space<vmem>>, %arg11: memref<128x32xbf16, #tpu.memory_space<vmem>>, %arg12: memref<128x1xf32, #tpu.memory_space<vmem>>, %arg13: memref<1x128x128xf32, #tpu.memory_space<vmem>>, %arg14: memref<1x32x128xf32, #tpu.memory_space<vmem>>, %arg15: memref<128x128xf32, #tpu.memory_space<vmem>>) attributes {dimension_semantics = [#tpu.dimension_semantics<parallel>, #tpu.dimension_semantics<arbitrary>], iteration_bounds = array<i64: 1, 2>, scalar_prefetch = 1 : i64, scratch_operands = 1 : i64, tpu.core_type = #tpu.core_type<tc>, window_params = [{transform_indices = @transform_0, window_bounds = array<i64: 1, 128, 128>}, {pipeline_mode = #tpu.pipeline_mode<synchronous>, transform_indices = @transform_1, window_bounds = array<i64: 4, 128>}, {transform_indices = @transform_2, window_bounds = array<i64: 32, 128>}, {pipeline_mode = #tpu.pipeline_mode<synchronous>, transform_indices = @transform_3, window_bounds = array<i64: 128, 1>}, {pipeline_mode = #tpu.pipeline_mode<synchronous>, transform_indices = @transform_4, window_bounds = array<i64: 32, 128>}, {pipeline_mode = #tpu.pipeline_mode<synchronous>, transform_indices = @transform_5, window_bounds = array<i64: 32, 1>}, {pipeline_mode = #tpu.pipeline_mode<synchronous>, transform_indices = @transform_6, window_bounds = array<i64: 32, 128>}, {pipeline_mode = #tpu.pipeline_mode<synchronous>, transform_indices = @transform_7, window_bounds = array<i64: 32, 1>}, {pipeline_mode = #tpu.pipeline_mode<synchronous>, transform_indices = @transform_8, window_bounds = array<i64: 128, 32>}, {pipeline_mode = #tpu.pipeline_mode<synchronous>, transform_indices = @transform_9, window_bounds = array<i64: 128, 1>}, {transform_indices = @transform_10, window_bounds = array<i64: 1, 128, 128>}, {transform_indices = @transform_11, window_bounds = array<i64: 1, 32, 128>}]} {
    %c0 = arith.constant 0 : index
    %c0_0 = arith.constant 0 : index
    %c0_1 = arith.constant 0 : index
    %0 = vector.load %arg3[%c0, %c0_0, %c0_1] : memref<1x128x128xbf16, #tpu.memory_space<vmem>>, vector<1x128x128xbf16>
    %1 = vector.shape_cast %0 : vector<1x128x128xbf16> to vector<128x128xbf16>
    %c0_2 = arith.constant 0 : index
    %c0_3 = arith.constant 0 : index
    %2 = vector.load %arg4[%c0_2, %c0_3] : memref<4x128xbf16, #tpu.memory_space<vmem>>, vector<4x128xbf16>
    %cst = arith.constant dense<0.000000e+00> : vector<128x4xf32>
    %3 = tpu.matmul %1, %2, %cst {dimension_numbers = #tpu.dot_dimension_numbers<[1], [1], [0], [0], [0, 0, 1, 0], [], []>} : vector<128x128xbf16>, vector<4x128xbf16>, vector<128x4xf32> -> vector<128x4xf32>
    %cst_4 = arith.constant dense<0.000000e+00> : vector<4x128xf32>
    %4 = tpu.matmul %2, %1, %cst_4 {dimension_numbers = #tpu.dot_dimension_numbers<[1], [1], [0], [0], [0, 0, 1, 0], [], []>} : vector<4x128xbf16>, vector<128x128xbf16>, vector<4x128xf32> -> vector<4x128xf32>
    %c0_i32 = arith.constant 0 : i32
    %5 = arith.cmpi eq, %arg1, %c0_i32 : i32
    %6 = arith.extui %5 : i1 to i32
    %c0_i32_5 = arith.constant 0 : i32
    %7 = arith.cmpi ne, %6, %c0_i32_5 : i32
    scf.if %7 {
      %cst_33 = arith.constant 0.000000e+00 : f32
      %58 = vector.broadcast %cst_33 : f32 to vector<128x128xf32>
      %c0_34 = arith.constant 0 : index
      %c0_35 = arith.constant 0 : index
      %59 = vector.load %arg15[%c0_34, %c0_35] : memref<128x128xf32, #tpu.memory_space<vmem>>, vector<128x128xf32>
      tpu.vector_store %arg15[%c0_34, %c0_35], %58 {strides = array<i32>} : memref<128x128xf32, #tpu.memory_space<vmem>>, vector<128x128xf32>,
    } else {
    }
    %c0_6 = arith.constant 0 : index
    %c0_7 = arith.constant 0 : index
    %8 = vector.load %arg5[%c0_6, %c0_7] : memref<32x128xbf16, #tpu.memory_space<vmem>>, vector<32x128xbf16>
    %9 = arith.extf %8 : vector<32x128xbf16> to vector<32x128xf32>
    %cst_8 = arith.constant 1.000000e+00 : f32
    %10 = vector.broadcast %cst_8 : f32 to vector<4x128xf32>
    %11 = arith.addf %10, %4 : vector<4x128xf32>
    %12 = vector.shape_cast %11 : vector<4x128xf32> to vector<4x1x128xf32>
    %13 = vector.shape_cast %9 : vector<32x128xf32> to vector<1x32x128xf32>
    %14 = vector.broadcast %12 : vector<4x1x128xf32> to vector<4x32x128xf32>
    %15 = vector.broadcast %13 : vector<1x32x128xf32> to vector<4x32x128xf32>
    %16 = arith.mulf %14, %15 : vector<4x32x128xf32>
    %17 = vector.shape_cast %16 : vector<4x32x128xf32> to vector<128x128xf32>
    %18 = arith.truncf %17 : vector<128x128xf32> to vector<128x128xbf16>
    %c0_9 = arith.constant 0 : index
    %c0_10 = arith.constant 0 : index
    %19 = vector.load %arg15[%c0_9, %c0_10] : memref<128x128xf32, #tpu.memory_space<vmem>>, vector<128x128xf32>
    %cst_11 = arith.constant dense<0.000000e+00> : vector<128x128xf32>
    %20 = tpu.matmul %18, %1, %cst_11 {dimension_numbers = #tpu.dot_dimension_numbers<[1], [0], [0], [1], [0, 0, 1, 1], [], []>} : vector<128x128xbf16>, vector<128x128xbf16>, vector<128x128xf32> -> vector<128x128xf32>
    %21 = arith.addf %19, %20 : vector<128x128xf32>
    %c0_12 = arith.constant 0 : index
    %c0_13 = arith.constant 0 : index
    %22 = vector.load %arg15[%c0_12, %c0_13] : memref<128x128xf32, #tpu.memory_space<vmem>>, vector<128x128xf32>
    tpu.vector_store %arg15[%c0_12, %c0_13], %21 {strides = array<i32>} : memref<128x128xf32, #tpu.memory_space<vmem>>, vector<128x128xf32>,
    %c1_i32 = arith.constant 1 : i32
    %23 = arith.cmpi eq, %arg1, %c1_i32 : i32
    %24 = arith.extui %23 : i1 to i32
    %c0_i32_14 = arith.constant 0 : i32
    %25 = arith.cmpi ne, %24, %c0_i32_14 : i32
    scf.if %25 {
      %c0_33 = arith.constant 0 : index
      %c0_34 = arith.constant 0 : index
      %58 = vector.load %arg15[%c0_33, %c0_34] : memref<128x128xf32, #tpu.memory_space<vmem>>, vector<128x128xf32>
      %c0_35 = arith.constant 0 : index
      %c0_36 = arith.constant 0 : index
      %59 = vector.load %arg6[%c0_35, %c0_36] : memref<128x1xf32, #tpu.memory_space<vmem>>, vector<128x1xf32>
      %60 = vector.broadcast %59 : vector<128x1xf32> to vector<128x128xf32>
      %61 = arith.addf %58, %60 : vector<128x128xf32>
      %cst_37 = arith.constant 0.000000e+00 : f32
      %62 = vector.broadcast %cst_37 : f32 to vector<128x128xf32>
      %63 = arith.maximumf %61, %62 : vector<128x128xf32>
      %c0_38 = arith.constant 0 : index
      %c0_39 = arith.constant 0 : index
      %64 = vector.load %arg7[%c0_38, %c0_39] : memref<32x128xbf16, #tpu.memory_space<vmem>>, vector<32x128xbf16>
      %65 = arith.truncf %63 : vector<128x128xf32> to vector<128x128xbf16>
      %cst_40 = arith.constant dense<0.000000e+00> : vector<32x128xf32>
      %66 = tpu.matmul %64, %65, %cst_40 {dimension_numbers = #tpu.dot_dimension_numbers<[1], [0], [0], [1], [0, 0, 1, 1], [], []>} : vector<32x128xbf16>, vector<128x128xbf16>, vector<32x128xf32> -> vector<32x128xf32>
      %c0_41 = arith.constant 0 : index
      %c0_42 = arith.constant 0 : index
      %67 = vector.load %arg8[%c0_41, %c0_42] : memref<32x1xf32, #tpu.memory_space<vmem>>, vector<32x1xf32>
      %68 = vector.broadcast %67 : vector<32x1xf32> to vector<32x128xf32>
      %69 = arith.addf %66, %68 : vector<32x128xf32>
      %c0_43 = arith.constant 0 : index
      %c0_44 = arith.constant 0 : index
      %c0_45 = arith.constant 0 : index
      %70 = vector.load %arg14[%c0_43, %c0_44, %c0_45] : memref<1x32x128xf32, #tpu.memory_space<vmem>>, vector<1x32x128xf32>
      %71 = vector.shape_cast %70 : vector<1x32x128xf32> to vector<32x128xf32>
      %72 = vector.shape_cast %69 : vector<32x128xf32> to vector<1x32x128xf32>
      tpu.vector_store %arg14[%c0_43, %c0_44, %c0_45], %72 {strides = array<i32>} : memref<1x32x128xf32, #tpu.memory_space<vmem>>, vector<1x32x128xf32>,
    } else {
    }
    %26 = arith.index_cast %arg0 : i32 to index
    %27 = memref.load %arg2[%26] : memref<1xi32, #tpu.memory_space<smem>>
    %c1_i32_15 = arith.constant 1 : i32
    %28 = arith.subi %27, %c1_i32_15 : i32
    %29 = tpu.iota {dimensions = array<i32: 1>} : vector<128x4xi32>
    %30 = vector.broadcast %28 : i32 to vector<128x4xi32>
    %31 = arith.cmpi eq, %29, %30 : vector<128x4xi32>
    %cst_16 = arith.constant 0.000000e+00 : f32
    %32 = vector.broadcast %cst_16 : f32 to vector<128x4xf32>
    %33 = arith.select %31, %3, %32 : vector<128x4xi1>, vector<128x4xf32>
    %cst_17 = arith.constant dense<0.000000e+00> : vector<128xf32>
    %34 = vector.multi_reduction <add>, %33, %cst_17 [1] : vector<128x4xf32> to vector<128xf32>
    %35 = vector.shape_cast %34 : vector<128xf32> to vector<128x1xf32>
    %36 = arith.extf %1 : vector<128x128xbf16> to vector<128x128xf32>
    %cst_18 = arith.constant 1.000000e+00 : f32
    %37 = vector.broadcast %cst_18 : f32 to vector<128x1xf32>
    %38 = arith.addf %37, %35 : vector<128x1xf32>
    %39 = vector.broadcast %38 : vector<128x1xf32> to vector<128x128xf32>
    %40 = arith.mulf %36, %39 : vector<128x128xf32>
    %c0_19 = arith.constant 0 : index
    %c0_20 = arith.constant 0 : index
    %41 = vector.load %arg9[%c0_19, %c0_20] : memref<32x128xbf16, #tpu.memory_space<vmem>>, vector<32x128xbf16>
    %42 = arith.truncf %40 : vector<128x128xf32> to vector<128x128xbf16>
    %cst_21 = arith.constant dense<0.000000e+00> : vector<32x128xf32>
    %43 = tpu.matmul %41, %42, %cst_21 {dimension_numbers = #tpu.dot_dimension_numbers<[1], [1], [0], [0], [0, 0, 1, 0], [], []>} : vector<32x128xbf16>, vector<128x128xbf16>, vector<32x128xf32> -> vector<32x128xf32>
    %c0_22 = arith.constant 0 : index
    %c0_23 = arith.constant 0 : index
    %44 = vector.load %arg10[%c0_22, %c0_23] : memref<32x1xf32, #tpu.memory_space<vmem>>, vector<32x1xf32>
    %45 = vector.broadcast %44 : vector<32x1xf32> to vector<32x128xf32>
    %46 = arith.addf %43, %45 : vector<32x128xf32>
    %cst_24 = arith.constant 0.000000e+00 : f32
    %47 = vector.broadcast %cst_24 : f32 to vector<32x128xf32>
    %48 = arith.maximumf %46, %47 : vector<32x128xf32>
    %c0_25 = arith.constant 0 : index
    %c0_26 = arith.constant 0 : index
    %49 = vector.load %arg11[%c0_25, %c0_26] : memref<128x32xbf16, #tpu.memory_space<vmem>>, vector<128x32xbf16>
    %50 = arith.truncf %48 : vector<32x128xf32> to vector<32x128xbf16>
    %cst_27 = arith.constant dense<0.000000e+00> : vector<128x128xf32>
    %51 = tpu.matmul %49, %50, %cst_27 {dimension_numbers = #tpu.dot_dimension_numbers<[1], [0], [0], [1], [0, 0, 1, 1], [], []>} : vector<128x32xbf16>, vector<32x128xbf16>, vector<128x128xf32> -> vector<128x128xf32>
    %c0_28 = arith.constant 0 : index
    %c0_29 = arith.constant 0 : index
    %52 = vector.load %arg12[%c0_28, %c0_29] : memref<128x1xf32, #tpu.memory_space<vmem>>, vector<128x1xf32>
    %53 = vector.broadcast %52 : vector<128x1xf32> to vector<128x128xf32>
    %54 = arith.addf %51, %53 : vector<128x128xf32>
    %c0_30 = arith.constant 0 : index
    %c0_31 = arith.constant 0 : index
    %c0_32 = arith.constant 0 : index
    %55 = vector.load %arg13[%c0_30, %c0_31, %c0_32] : memref<1x128x128xf32, #tpu.memory_space<vmem>>, vector<1x128x128xf32>
    %56 = vector.shape_cast %55 : vector<1x128x128xf32> to vector<128x128xf32>
    %57 = vector.shape_cast %54 : vector<128x128xf32> to vector<1x128x128xf32>
    tpu.vector_store %arg13[%c0_30, %c0_31, %c0_32], %57 {strides = array<i32>} : memref<1x128x128xf32, #tpu.memory_space<vmem>>, vector<1x128x128xf32>,
    return
  }
  func.func @transform_0(%arg0: i32, %arg1: i32, %arg2: memref<1xi32, #tpu.memory_space<smem>>) -> (i32, i32, i32) {
    %c0_i32 = arith.constant 0 : i32
    %c0_i32_0 = arith.constant 0 : i32
    return %arg0, %arg1, %c0_i32 : i32, i32, i32
  }
  func.func @transform_1(%arg0: i32, %arg1: i32, %arg2: memref<1xi32, #tpu.memory_space<smem>>) -> (i32, i32) {
    %c0_i32 = arith.constant 0 : i32
    %c0_i32_0 = arith.constant 0 : i32
    %c0_i32_1 = arith.constant 0 : i32
    return %c0_i32, %c0_i32_0 : i32, i32
  }
  func.func @transform_2(%arg0: i32, %arg1: i32, %arg2: memref<1xi32, #tpu.memory_space<smem>>) -> (i32, i32) {
    %c0_i32 = arith.constant 0 : i32
    %c0_i32_0 = arith.constant 0 : i32
    return %c0_i32, %arg1 : i32, i32
  }
  func.func @transform_3(%arg0: i32, %arg1: i32, %arg2: memref<1xi32, #tpu.memory_space<smem>>) -> (i32, i32) {
    %c0_i32 = arith.constant 0 : i32
    %c0_i32_0 = arith.constant 0 : i32
    %c0_i32_1 = arith.constant 0 : i32
    return %c0_i32, %c0_i32_0 : i32, i32
  }
  func.func @transform_4(%arg0: i32, %arg1: i32, %arg2: memref<1xi32, #tpu.memory_space<smem>>) -> (i32, i32) {
    %c0_i32 = arith.constant 0 : i32
    %c0_i32_0 = arith.constant 0 : i32
    %c0_i32_1 = arith.constant 0 : i32
    return %c0_i32, %c0_i32_0 : i32, i32
  }
  func.func @transform_5(%arg0: i32, %arg1: i32, %arg2: memref<1xi32, #tpu.memory_space<smem>>) -> (i32, i32) {
    %c0_i32 = arith.constant 0 : i32
    %c0_i32_0 = arith.constant 0 : i32
    %c0_i32_1 = arith.constant 0 : i32
    return %c0_i32, %c0_i32_0 : i32, i32
  }
  func.func @transform_6(%arg0: i32, %arg1: i32, %arg2: memref<1xi32, #tpu.memory_space<smem>>) -> (i32, i32) {
    %c0_i32 = arith.constant 0 : i32
    %c0_i32_0 = arith.constant 0 : i32
    %c0_i32_1 = arith.constant 0 : i32
    return %c0_i32, %c0_i32_0 : i32, i32
  }
  func.func @transform_7(%arg0: i32, %arg1: i32, %arg2: memref<1xi32, #tpu.memory_space<smem>>) -> (i32, i32) {
    %c0_i32 = arith.constant 0 : i32
    %c0_i32_0 = arith.constant 0 : i32
    %c0_i32_1 = arith.constant 0 : i32
    return %c0_i32, %c0_i32_0 : i32, i32
  }
  func.func @transform_8(%arg0: i32, %arg1: i32, %arg2: memref<1xi32, #tpu.memory_space<smem>>) -> (i32, i32) {
    %c0_i32 = arith.constant 0 : i32
    %c0_i32_0 = arith.constant 0 : i32
    %c0_i32_1 = arith.constant 0 : i32
    return %c0_i32, %c0_i32_0 : i32, i32
  }
  func.func @transform_9(%arg0: i32, %arg1: i32, %arg2: memref<1xi32, #tpu.memory_space<smem>>) -> (i32, i32) {
    %c0_i32 = arith.constant 0 : i32
    %c0_i32_0 = arith.constant 0 : i32
    %c0_i32_1 = arith.constant 0 : i32
    return %c0_i32, %c0_i32_0 : i32, i32
  }
  func.func @transform_10(%arg0: i32, %arg1: i32, %arg2: memref<1xi32, #tpu.memory_space<smem>>) -> (i32, i32, i32) {
    %c0_i32 = arith.constant 0 : i32
    %c0_i32_0 = arith.constant 0 : i32
    return %arg0, %c0_i32, %arg1 : i32, i32, i32
  }
  func.func @transform_11(%arg0: i32, %arg1: i32, %arg2: memref<1xi32, #tpu.memory_space<smem>>) -> (i32, i32, i32) {
    %c0_i32 = arith.constant 0 : i32
    %c0_i32_0 = arith.constant 0 : i32
    %c0_i32_1 = arith.constant 0 : i32
    return %arg0, %c0_i32, %c0_i32_0 : i32, i32, i32
  }
}

</mosaic_0001>

<llo_original>
// kernel: tpu_custom_call.1
$region0: #{tpu_custom_call.1}
  #allocation0 [shape = 'u32[]', space=smem, size = 0x4, offset = 0x4, fixed_abs, tag = 'smem constant byte address 0x4 - core index']
  #allocation1 [shape = 'u32[72,128]{1,0:T(1,128)}', space=vmem, size = 0x9000, scoped, tag = 'internal scratch']
  #allocation2 [shape = 'f32[128,128]{1,0:T(8,128)}', space=vmem, size = 0x10000, scoped, tag = 'scratch operand']
  #allocation3 [shape = 's32[1]{0}', space=sflag, size = 0x4, scoped, tag = 'scoped memory for tpu_custom_call.1']
  #allocation4 [shape = 's32[1]{0:T(128)S(6)}', space=smem, size = 0x200, scoped, tag = 'prefetched SMEM operand 0']
  %s0 = inlined_call_operand.<no memory space> [shape: s32[1], index: 0, kind: input, shape index: {}]
  %s1 = inlined_call_operand.vmem [shape: bf16[1,256,128], index: 1, kind: input, shape index: {}]
  %s2 = inlined_call_operand.vmem [shape: bf16[4,128], index: 2, kind: input, shape index: {}]
  %s3 = inlined_call_operand.vmem [shape: bf16[32,256], index: 3, kind: input, shape index: {}]
  %s4 = inlined_call_operand.vmem [shape: f32[128,1], index: 4, kind: input, shape index: {}]
  %s5 = inlined_call_operand.vmem [shape: bf16[32,128], index: 5, kind: input, shape index: {}]
  %s6 = inlined_call_operand.vmem [shape: f32[32,1], index: 6, kind: input, shape index: {}]
  %s7 = inlined_call_operand.vmem [shape: bf16[32,128], index: 7, kind: input, shape index: {}]
  %s8 = inlined_call_operand.vmem [shape: f32[32,1], index: 8, kind: input, shape index: {}]
  %s9 = inlined_call_operand.vmem [shape: bf16[128,32], index: 9, kind: input, shape index: {}]
  %s10 = inlined_call_operand.vmem [shape: f32[128,1], index: 10, kind: input, shape index: {}]
  %s11 = inlined_call_operand.hbm [shape: f32[1,128,256], index: 11, kind: output, shape index: {0}]
  %s12 = inlined_call_operand.hbm [shape: f32[1,32,128], index: 12, kind: output, shape index: {1}]
  %13 = xla_tuple %s11, %s12
  %s14 = sld [smem:[#allocation0]]
  $region130: #{tpu_custom_call.1} parent=0
    _
  %s16 = ssub.s32 1, %s14
  %s17 = scalar_select 0, %s16, %s14
  %18 = sst [smem:[#allocation4]] %s0
  $region1: #{tpu_custom_call.1} parent=0
    #allocation5 [shape = 'u8[16384]{0}', space=vmem, size = 0x4000, scoped, tag = 'input window, operand 3']
    #allocation6 [shape = 'u8[131072]{0}', space=vmem, size = 0x20000, scoped, tag = 'output window, operand 0']
    #allocation7 [shape = 's32[2]{0}', space=sflag, size = 0x8, scoped, tag = 'scoped memory for tpu_custom_call.1']
    #allocation8 [shape = 'u8[16384]{0}', space=vmem, size = 0x4000, scoped, tag = 'output window, operand 1, single buffered']
    #allocation9 [shape = 's32[1]{0}', space=sflag, size = 0x4, scoped, tag = 'scoped memory for tpu_custom_call.1']
    %19 = vsyncpa [#allocation7], 0
    %s20 = scalar_lea.sflag [#allocation7], 1
    %21 = vsyncpa %s20, 0
    %22 = vsyncpa [#allocation9], 0
    loop: start=0, step=1, limit=4
    $region2: #{tpu_custom_call.1} parent=1 // loop_pre_header
      _
    $region3: #{tpu_custom_call.1} parent=1 // loop_header
      %s24 = sphi 0, %s28
      %p25 = scmp.ge.s32.totalorder %s24, 4
      %s31 = sphi 0, %s43
      %s32 = sphi 0, %s39
      %s33 = sphi 0, %s31
      %s34 = sphi 0, %s32
      %s35 = sphi 0, %s33
      %s36 = sphi 0, %s34
      %s48 = sphi 0, %s50
      %s51 = sphi 0, %s48
      %s52 = sphi 0, %s51
      %s68 = sphi 0, %s52
      %s72 = sphi 0, %s72
      %s74 = sphi 0, %s72
      %s75 = sphi 0, %s74
      %s89 = sphi 0, %s75
      %s95 = sphi 0, %s97
      %s98 = sphi 0, %s95
      %s99 = sphi 0, %s98
      %s115 = sphi 0, %s99
      %s119 = sphi 0, %s119
      %s121 = sphi 0, %s119
      %s122 = sphi 0, %s121
      %s136 = sphi 0, %s122
      %s140 = sphi 0, %s140
      %s142 = sphi 0, %s140
      %s143 = sphi 0, %s142
      %s157 = sphi 0, %s143
      %s161 = sphi 0, %s161
      %s163 = sphi 0, %s161
      %s164 = sphi 0, %s163
      %s178 = sphi 0, %s164
      %s182 = sphi 0, %s182
      %s184 = sphi 0, %s182
      %s185 = sphi 0, %s184
      %s199 = sphi 0, %s185
      %s203 = sphi 0, %s203
      %s205 = sphi 0, %s203
      %s206 = sphi 0, %s205
      %s220 = sphi 0, %s206
      %s224 = sphi 0, %s224
      %s226 = sphi 0, %s224
      %s227 = sphi 0, %s226
      %s241 = sphi 0, %s227
      %s245 = sphi 0, %s245
      %s247 = sphi 0, %s245
      %s248 = sphi 0, %s247
      %s262 = sphi 0, %s248
      %s270 = sphi 0, %s272
      %s273 = sphi 0, %s270
      %s274 = sphi 0, %s273
      %s290 = sphi 0, %s274
      %s296 = sphi 0, %s298
      %s299 = sphi 0, %s296
      %s300 = sphi 0, %s299
      %s316 = sphi 0, %s300
    $region4: #{tpu_custom_call.1} parent=1 // loop_header_branch
      %27 = sbr.rel (%p25) target = $region8
    $region5: #{tpu_custom_call.1} parent=1 // loop_body
      %s29 = ssub.s32 %s24, 1
      %s30 = ssub.s32 %s24, 2
      %s37 = sadd.s32 1, %s32
      %p38 = scmp.ge.s32.totalorder %s37, 2
      %s39 = scalar_select %p38, 0, %s37
      %s40 = sadd.s32 1, %s31
      %s41 = scalar_select %p38, %s40, %s31
      %p42 = scmp.ge.s32.totalorder %s41, 1
      %s43 = scalar_select %p42, 0, %s41
      %s44 = ssub.s32 %s31, %s43
      %s45 = ssub.s32 %s32, %s39
      %s46 = sor.u32 %s44, %s45
      %p47 = scmp.eq.s32.totalorder %s46, 0
      %s49 = sadd.s32 %s48, 1
      %s50 = scalar_select %p47, %s48, %s49
      %p53 = pneg %p47
      %p54 = scmp.eq.s32.totalorder %s24, 1
      %p55 = por %p53, %p54
      %p56 = scmp.ne.s32.totalorder %s48, %s51
      %p57 = scmp.eq.s32.totalorder %s24, 0
      %p58 = por %p56, %p57
      %p59 = scmp.ne.s32.totalorder %s48, %s51
      %p60 = scmp.eq.s32.totalorder %s29, 1
      %p61 = por %p59, %p60
      %p62 = scmp.ne.s32.totalorder %s51, %s52
      %p63 = scmp.eq.s32.totalorder %s29, 0
      %p64 = por %p62, %p63
      %p65 = scmp.ne.s32.totalorder %s51, %s52
      %p66 = scmp.eq.s32.totalorder %s30, 1
      %p67 = por %p65, %p66
      %p69 = scmp.ne.s32.totalorder %s52, %s68
      %p70 = scmp.eq.s32.totalorder %s30, 0
      %p71 = por %p69, %p70
      %s73 = sadd.s32 %s72, 1
      %p76 = scmp.eq.s32.totalorder %s24, 1
      %p77 = scmp.ne.s32.totalorder %s72, %s74
      %p78 = scmp.eq.s32.totalorder %s24, 0
      %p79 = por %p77, %p78
      %p80 = scmp.ne.s32.totalorder %s72, %s74
      %p81 = scmp.eq.s32.totalorder %s29, 1
      %p82 = por %p80, %p81
      %p83 = scmp.ne.s32.totalorder %s74, %s75
      %p84 = scmp.eq.s32.totalorder %s29, 0
      %p85 = por %p83, %p84
      %p86 = scmp.ne.s32.totalorder %s74, %s75
      %p87 = scmp.eq.s32.totalorder %s30, 1
      %p88 = por %p86, %p87
      %p90 = scmp.ne.s32.totalorder %s75, %s89
      %p91 = scmp.eq.s32.totalorder %s30, 0
      %p92 = por %p90, %p91
      %s93 = ssub.s32 %s32, %s39
      %p94 = scmp.eq.s32.totalorder %s93, 0
      %s96 = sadd.s32 %s95, 1
      %s97 = scalar_select %p94, %s95, %s96
      %p100 = pneg %p94
      %p101 = scmp.eq.s32.totalorder %s24, 1
      %p102 = por %p100, %p101
      %p103 = scmp.ne.s32.totalorder %s95, %s98
      %p104 = scmp.eq.s32.totalorder %s24, 0
      %p105 = por %p103, %p104
      %p106 = scmp.ne.s32.totalorder %s95, %s98
      %p107 = scmp.eq.s32.totalorder %s29, 1
      %p108 = por %p106, %p107
      %p109 = scmp.ne.s32.totalorder %s98, %s99
      %p110 = scmp.eq.s32.totalorder %s29, 0
      %p111 = por %p109, %p110
      %p112 = scmp.ne.s32.totalorder %s98, %s99
      %p113 = scmp.eq.s32.totalorder %s30, 1
      %p114 = por %p112, %p113
      %p116 = scmp.ne.s32.totalorder %s99, %s115
      %p117 = scmp.eq.s32.totalorder %s30, 0
      %p118 = por %p116, %p117
      %s120 = sadd.s32 %s119, 1
      %p123 = scmp.eq.s32.totalorder %s24, 1
      %p124 = scmp.ne.s32.totalorder %s119, %s121
      %p125 = scmp.eq.s32.totalorder %s24, 0
      %p126 = por %p124, %p125
      %p127 = scmp.ne.s32.totalorder %s119, %s121
      %p128 = scmp.eq.s32.totalorder %s29, 1
      %p129 = por %p127, %p128
      %p130 = scmp.ne.s32.totalorder %s121, %s122
      %p131 = scmp.eq.s32.totalorder %s29, 0
      %p132 = por %p130, %p131
      %p133 = scmp.ne.s32.totalorder %s121, %s122
      %p134 = scmp.eq.s32.totalorder %s30, 1
      %p135 = por %p133, %p134
      %p137 = scmp.ne.s32.totalorder %s122, %s136
      %p138 = scmp.eq.s32.totalorder %s30, 0
      %p139 = por %p137, %p138
      %s141 = sadd.s32 %s140, 1
      %p144 = scmp.eq.s32.totalorder %s24, 1
      %p145 = scmp.ne.s32.totalorder %s140, %s142
      %p146 = scmp.eq.s32.totalorder %s24, 0
      %p147 = por %p145, %p146
      %p148 = scmp.ne.s32.totalorder %s140, %s142
      %p149 = scmp.eq.s32.totalorder %s29, 1
      %p150 = por %p148, %p149
      %p151 = scmp.ne.s32.totalorder %s142, %s143
      %p152 = scmp.eq.s32.totalorder %s29, 0
      %p153 = por %p151, %p152
      %p154 = scmp.ne.s32.totalorder %s142, %s143
      %p155 = scmp.eq.s32.totalorder %s30, 1
      %p156 = por %p154, %p155
      %p158 = scmp.ne.s32.totalorder %s143, %s157
      %p159 = scmp.eq.s32.totalorder %s30, 0
      %p160 = por %p158, %p159
      %s162 = sadd.s32 %s161, 1
      %p165 = scmp.eq.s32.totalorder %s24, 1
      %p166 = scmp.ne.s32.totalorder %s161, %s163
      %p167 = scmp.eq.s32.totalorder %s24, 0
      %p168 = por %p166, %p167
      %p169 = scmp.ne.s32.totalorder %s161, %s163
      %p170 = scmp.eq.s32.totalorder %s29, 1
      %p171 = por %p169, %p170
      %p172 = scmp.ne.s32.totalorder %s163, %s164
      %p173 = scmp.eq.s32.totalorder %s29, 0
      %p174 = por %p172, %p173
      %p175 = scmp.ne.s32.totalorder %s163, %s164
      %p176 = scmp.eq.s32.totalorder %s30, 1
      %p177 = por %p175, %p176
      %p179 = scmp.ne.s32.totalorder %s164, %s178
      %p180 = scmp.eq.s32.totalorder %s30, 0
      %p181 = por %p179, %p180
      %s183 = sadd.s32 %s182, 1
      %p186 = scmp.eq.s32.totalorder %s24, 1
      %p187 = scmp.ne.s32.totalorder %s182, %s184
      %p188 = scmp.eq.s32.totalorder %s24, 0
      %p189 = por %p187, %p188
      %p190 = scmp.ne.s32.totalorder %s182, %s184
      %p191 = scmp.eq.s32.totalorder %s29, 1
      %p192 = por %p190, %p191
      %p193 = scmp.ne.s32.totalorder %s184, %s185
      %p194 = scmp.eq.s32.totalorder %s29, 0
      %p195 = por %p193, %p194
      %p196 = scmp.ne.s32.totalorder %s184, %s185
      %p197 = scmp.eq.s32.totalorder %s30, 1
      %p198 = por %p196, %p197
      %p200 = scmp.ne.s32.totalorder %s185, %s199
      %p201 = scmp.eq.s32.totalorder %s30, 0
      %p202 = por %p200, %p201
      %s204 = sadd.s32 %s203, 1
      %p207 = scmp.eq.s32.totalorder %s24, 1
      %p208 = scmp.ne.s32.totalorder %s203, %s205
      %p209 = scmp.eq.s32.totalorder %s24, 0
      %p210 = por %p208, %p209
      %p211 = scmp.ne.s32.totalorder %s203, %s205
      %p212 = scmp.eq.s32.totalorder %s29, 1
      %p213 = por %p211, %p212
      %p214 = scmp.ne.s32.totalorder %s205, %s206
      %p215 = scmp.eq.s32.totalorder %s29, 0
      %p216 = por %p214, %p215
      %p217 = scmp.ne.s32.totalorder %s205, %s206
      %p218 = scmp.eq.s32.totalorder %s30, 1
      %p219 = por %p217, %p218
      %p221 = scmp.ne.s32.totalorder %s206, %s220
      %p222 = scmp.eq.s32.totalorder %s30, 0
      %p223 = por %p221, %p222
      %s225 = sadd.s32 %s224, 1
      %p228 = scmp.eq.s32.totalorder %s24, 1
      %p229 = scmp.ne.s32.totalorder %s224, %s226
      %p230 = scmp.eq.s32.totalorder %s24, 0
      %p231 = por %p229, %p230
      %p232 = scmp.ne.s32.totalorder %s224, %s226
      %p233 = scmp.eq.s32.totalorder %s29, 1
      %p234 = por %p232, %p233
      %p235 = scmp.ne.s32.totalorder %s226, %s227
      %p236 = scmp.eq.s32.totalorder %s29, 0
      %p237 = por %p235, %p236
      %p238 = scmp.ne.s32.totalorder %s226, %s227
      %p239 = scmp.eq.s32.totalorder %s30, 1
      %p240 = por %p238, %p239
      %p242 = scmp.ne.s32.totalorder %s227, %s241
      %p243 = scmp.eq.s32.totalorder %s30, 0
      %p244 = por %p242, %p243
      %s246 = sadd.s32 %s245, 1
      %p249 = scmp.eq.s32.totalorder %s24, 1
      %p250 = scmp.ne.s32.totalorder %s245, %s247
      %p251 = scmp.eq.s32.totalorder %s24, 0
      %p252 = por %p250, %p251
      %p253 = scmp.ne.s32.totalorder %s245, %s247
      %p254 = scmp.eq.s32.totalorder %s29, 1
      %p255 = por %p253, %p254
      %p256 = scmp.ne.s32.totalorder %s247, %s248
      %p257 = scmp.eq.s32.totalorder %s29, 0
      %p258 = por %p256, %p257
      %p259 = scmp.ne.s32.totalorder %s247, %s248
      %p260 = scmp.eq.s32.totalorder %s30, 1
      %p261 = por %p259, %p260
      %p263 = scmp.ne.s32.totalorder %s248, %s262
      %p264 = scmp.eq.s32.totalorder %s30, 0
      %p265 = por %p263, %p264
      %s266 = ssub.s32 %s31, %s43
      %s267 = ssub.s32 %s32, %s39
      %s268 = sor.u32 %s266, %s267
      %p269 = scmp.eq.s32.totalorder %s268, 0
      %s271 = sadd.s32 %s270, 1
      %s272 = scalar_select %p269, %s270, %s271
      %p275 = pneg %p269
      %p276 = scmp.eq.s32.totalorder %s24, 1
      %p277 = por %p275, %p276
      %p278 = scmp.ne.s32.totalorder %s270, %s273
      %p279 = scmp.eq.s32.totalorder %s24, 0
      %p280 = por %p278, %p279
      %p281 = scmp.ne.s32.totalorder %s270, %s273
      %p282 = scmp.eq.s32.totalorder %s29, 1
      %p283 = por %p281, %p282
      %p284 = scmp.ne.s32.totalorder %s273, %s274
      %p285 = scmp.eq.s32.totalorder %s29, 0
      %p286 = por %p284, %p285
      %p287 = scmp.ne.s32.totalorder %s273, %s274
      %p288 = scmp.eq.s32.totalorder %s30, 1
      %p289 = por %p287, %p288
      %p291 = scmp.ne.s32.totalorder %s274, %s290
      %p292 = scmp.eq.s32.totalorder %s30, 0
      %p293 = por %p291, %p292
      %s294 = ssub.s32 %s31, %s43
      %p295 = scmp.eq.s32.totalorder %s294, 0
      %s297 = sadd.s32 %s296, 1
      %s298 = scalar_select %p295, %s296, %s297
      %p301 = pneg %p295
      %p302 = scmp.eq.s32.totalorder %s24, 1
      %p303 = por %p301, %p302
      %p304 = scmp.ne.s32.totalorder %s296, %s299
      %p305 = scmp.eq.s32.totalorder %s24, 0
      %p306 = por %p304, %p305
      %p307 = scmp.ne.s32.totalorder %s296, %s299
      %p308 = scmp.eq.s32.totalorder %s29, 1
      %p309 = por %p307, %p308
      %p310 = scmp.ne.s32.totalorder %s299, %s300
      %p311 = scmp.eq.s32.totalorder %s29, 0
      %p312 = por %p310, %p311
      %p313 = scmp.ne.s32.totalorder %s299, %s300
      %p314 = scmp.eq.s32.totalorder %s30, 1
      %p315 = por %p313, %p314
      %p317 = scmp.ne.s32.totalorder %s300, %s316
      %p318 = scmp.eq.s32.totalorder %s30, 0
      %p319 = por %p317, %p318
      %p320 = scmp.le.s32.totalorder 1, %s24
      %p321 = scmp.lt.s32.totalorder %s24, 3
      %p322 = pnand %p320, %p321
      %p323 = pneg %p322
      // Predicated region
      $region9: #{tpu_custom_call.1} parent=5 // pred_check
        _
      $region10: #{tpu_custom_call.1} parent=5 // pred_check_branch
        %325 = sbr.rel (%p322) target = $region12
      $region11: #{tpu_custom_call.1} parent=5 // pred_region
        %s326 = ssub.s32 %s24, 1
        // Predicated region
        $region13: #{tpu_custom_call.1} parent=11 // pred_check
          %p327 = pneg %p85
        $region14: #{tpu_custom_call.1} parent=11 // pred_check_branch
          %329 = sbr.rel (%p327) target = $region16
        $region15: #{tpu_custom_call.1} parent=11 // pred_region
          _
        $region16: #{tpu_custom_call.1} parent=11 // pred_fallthru
          _
        // Predicated region
        $region17: #{tpu_custom_call.1} parent=11 // pred_check
          %p330 = pneg %p132
        $region18: #{tpu_custom_call.1} parent=11 // pred_check_branch
          %332 = sbr.rel (%p330) target = $region20
        $region19: #{tpu_custom_call.1} parent=11 // pred_region
          _
        $region20: #{tpu_custom_call.1} parent=11 // pred_fallthru
          _
        // Predicated region
        $region21: #{tpu_custom_call.1} parent=11 // pred_check
          %p333 = pneg %p153
        $region22: #{tpu_custom_call.1} parent=11 // pred_check_branch
          %335 = sbr.rel (%p333) target = $region24
        $region23: #{tpu_custom_call.1} parent=11 // pred_region
          _
        $region24: #{tpu_custom_call.1} parent=11 // pred_fallthru
          _
        // Predicated region
        $region25: #{tpu_custom_call.1} parent=11 // pred_check
          %p336 = pneg %p174
        $region26: #{tpu_custom_call.1} parent=11 // pred_check_branch
          %338 = sbr.rel (%p336) target = $region28
        $region27: #{tpu_custom_call.1} parent=11 // pred_region
          _
        $region28: #{tpu_custom_call.1} parent=11 // pred_fallthru
          _
        // Predicated region
        $region29: #{tpu_custom_call.1} parent=11 // pred_check
          %p339 = pneg %p195
        $region30: #{tpu_custom_call.1} parent=11 // pred_check_branch
          %341 = sbr.rel (%p339) target = $region32
        $region31: #{tpu_custom_call.1} parent=11 // pred_region
          _
        $region32: #{tpu_custom_call.1} parent=11 // pred_fallthru
          _
        // Predicated region
        $region33: #{tpu_custom_call.1} parent=11 // pred_check
          %p342 = pneg %p216
        $region34: #{tpu_custom_call.1} parent=11 // pred_check_branch
          %344 = sbr.rel (%p342) target = $region36
        $region35: #{tpu_custom_call.1} parent=11 // pred_region
          _
        $region36: #{tpu_custom_call.1} parent=11 // pred_fallthru
          _
        // Predicated region
        $region37: #{tpu_custom_call.1} parent=11 // pred_check
          %p345 = pneg %p237
        $region38: #{tpu_custom_call.1} parent=11 // pred_check_branch
          %347 = sbr.rel (%p345) target = $region40
        $region39: #{tpu_custom_call.1} parent=11 // pred_region
          _
        $region40: #{tpu_custom_call.1} parent=11 // pred_fallthru
          _
        // Predicated region
        $region41: #{tpu_custom_call.1} parent=11 // pred_check
          %p348 = pneg %p258
        $region42: #{tpu_custom_call.1} parent=11 // pred_check_branch
          %350 = sbr.rel (%p348) target = $region44
        $region43: #{tpu_custom_call.1} parent=11 // pred_region
          _
        $region44: #{tpu_custom_call.1} parent=11 // pred_fallthru
          _
      $region12: #{tpu_custom_call.1} parent=5 // pred_fallthru
        _
      %p351 = scmp.lt.s32.totalorder %s24, 2
      // Predicated region
      $region45: #{tpu_custom_call.1} parent=5 // pred_check
        %p352 = pneg %p351
      $region46: #{tpu_custom_call.1} parent=5 // pred_check_branch
        %354 = sbr.rel (%p352) target = $region48
      $region47: #{tpu_custom_call.1} parent=5 // pred_region
        // Predicated region
        $region49: #{tpu_custom_call.1} parent=47 // pred_check
          %p355 = pneg %p58
        $region50: #{tpu_custom_call.1} parent=47 // pred_check_branch
          %357 = sbr.rel (%p355) target = $region52
        $region51: #{tpu_custom_call.1} parent=47 // pred_region
          %s358 = smul.u32 16, %s32
          %p359 = scmp.lt.s32.totalorder %s31, 0
          %s360 = scalar_select %p359, %s31, 0
          %p361 = scmp.lt.s32.totalorder %s358, 31
          %s362 = scalar_select %p361, %s358, 31
          %s363 = smul.addr %s360, 32
          %s364 = sadd.s32 %s362, %s363
          %s365 = smul.addr %s364, 4
          %s366 = scalar_lea.vmem %s1, %s365
          %s367 = smul.u32 16, %s32
        $region52: #{tpu_custom_call.1} parent=47 // pred_fallthru
          _
        // Predicated region
        $region53: #{tpu_custom_call.1} parent=47 // pred_check
          %p368 = pneg %p105
        $region54: #{tpu_custom_call.1} parent=47 // pred_check_branch
          %370 = sbr.rel (%p368) target = $region56
        $region55: #{tpu_custom_call.1} parent=47 // pred_region
          %s371 = sand.u32 %s95, 1
          %s372 = sand.u32 %s95, 1
          %s373 = smul.addr %s372, 16
          %s374 = scalar_lea.vmem [#allocation5], %s373
          %s375 = smul.addr %s32, 4
          %s376 = scalar_lea.vmem %s3, %s375
          // Predicated region
          $region57: #{tpu_custom_call.1} parent=55 // pred_check
            _
          $region58: #{tpu_custom_call.1} parent=55 // pred_check_branch
            %378 = sbr.rel (0) target = $region60
          $region59: #{tpu_custom_call.1} parent=55 // pred_region
            // Predicated region
            $region61: #{tpu_custom_call.1} parent=59 // pred_check
              _
            $region62: #{tpu_custom_call.1} parent=59 // pred_check_branch
              %380 = sbr.rel target = $region64
            $region63: #{tpu_custom_call.1} parent=59 // pred_region
              // Predicated region
              $region76: #{tpu_custom_call.1} parent=63 // pred_check
                _
              $region77: #{tpu_custom_call.1} parent=63 // pred_check_branch
                %402 = sbr.rel (0) target = $region79
              $region78: #{tpu_custom_call.1} parent=63 // pred_region
                loop: start=0, step=1, limit=1
                $region80: #{tpu_custom_call.1} parent=78 // loop_pre_header
                  _
                $region81: #{tpu_custom_call.1} parent=78 // loop_header
                  %s404 = sphi 0, %s408
                  %p405 = scmp.ge.s32.totalorder %s404, 1
                  %s409 = sphi %s376, %s376
                  %s410 = sphi %s374, %s374
                $region82: #{tpu_custom_call.1} parent=78 // loop_header_branch
                  %407 = sbr.rel (%p405) target = $region86
                $region83: #{tpu_custom_call.1} parent=78 // loop_body
                  _
                $region84: #{tpu_custom_call.1} parent=78 // loop_footer
                  %s408 = sadd.s32 1, %s404
                $region85: #{tpu_custom_call.1} parent=78 // loop_footer_branch
                  %403 = sbr.rel target = $region81
                $region86: #{tpu_custom_call.1} parent=78 // loop_exit
                  _
                %s412 = ssub.s32 16, 1
                loop: start=0, step=1, limit=1
                $region87: #{tpu_custom_call.1} parent=78 // loop_pre_header
                  _
                $region88: #{tpu_custom_call.1} parent=78 // loop_header
                  %s414 = sphi 0, %s418
                  %p415 = scmp.ge.s32.totalorder %s414, 1
                  %s419 = sphi %s376, %s376
                  %s420 = sphi %s374, %s374
                $region89: #{tpu_custom_call.1} parent=78 // loop_header_branch
                  %417 = sbr.rel (%p415) target = $region93
                $region90: #{tpu_custom_call.1} parent=78 // loop_body
                  %v421 = vld [vmem:[%s419] sm:%s412]
                  %422 = vst [vmem:[%s420] sm:%s412] %v421
                  %v423 = vld [vmem:[%s419 + $0x8] sm:%s412]
                  %424 = vst [vmem:[%s420 + $0x4] sm:%s412] %v423
                  %v425 = vld [vmem:[%s419 + $0x10] sm:%s412]
                  %426 = vst [vmem:[%s420 + $0x8] sm:%s412] %v425
                  %v427 = vld [vmem:[%s419 + $0x18] sm:%s412]
                  %428 = vst [vmem:[%s420 + $0xc] sm:%s412] %v427
                $region91: #{tpu_custom_call.1} parent=78 // loop_footer
                  %s418 = sadd.s32 1, %s414
                $region92: #{tpu_custom_call.1} parent=78 // loop_footer_branch
                  %413 = sbr.rel target = $region88
                $region93: #{tpu_custom_call.1} parent=78 // loop_exit
                  _
              $region79: #{tpu_custom_call.1} parent=63 // pred_fallthru
                _
            $region64: #{tpu_custom_call.1} parent=59 // pred_fallthru
              _
            // Predicated region
            $region65: #{tpu_custom_call.1} parent=59 // pred_check
              _
            $region66: #{tpu_custom_call.1} parent=59 // pred_check_branch
              %382 = sbr.rel (0) target = $region68
            $region67: #{tpu_custom_call.1} parent=59 // pred_region
              %s384 = ssub.s32 16, 1
              loop: start=0, step=1, limit=1
              $region69: #{tpu_custom_call.1} parent=67 // loop_pre_header
                _
              $region70: #{tpu_custom_call.1} parent=67 // loop_header
                %s386 = sphi 0, %s390
                %p387 = scmp.ge.s32.totalorder %s386, 1
                %s391 = sphi %s376, %s376
                %s392 = sphi %s374, %s374
              $region71: #{tpu_custom_call.1} parent=67 // loop_header_branch
                %389 = sbr.rel (%p387) target = $region75
              $region72: #{tpu_custom_call.1} parent=67 // loop_body
                %v393 = vld [vmem:[%s391] sm:%s384]
                %394 = vst [vmem:[%s392] sm:%s384] %v393
                %v395 = vld [vmem:[%s391 + $0x8] sm:%s384]
                %396 = vst [vmem:[%s392 + $0x4] sm:%s384] %v395
                %v397 = vld [vmem:[%s391 + $0x10] sm:%s384]
                %398 = vst [vmem:[%s392 + $0x8] sm:%s384] %v397
                %v399 = vld [vmem:[%s391 + $0x18] sm:%s384]
                %400 = vst [vmem:[%s392 + $0xc] sm:%s384] %v399
              $region73: #{tpu_custom_call.1} parent=67 // loop_footer
                %s390 = sadd.s32 1, %s386
              $region74: #{tpu_custom_call.1} parent=67 // loop_footer_branch
                %385 = sbr.rel target = $region70
              $region75: #{tpu_custom_call.1} parent=67 // loop_exit
                _
            $region68: #{tpu_custom_call.1} parent=59 // pred_fallthru
              _
          $region60: #{tpu_custom_call.1} parent=55 // pred_fallthru
            _
          %429 = vnop
        $region56: #{tpu_custom_call.1} parent=47 // pred_fallthru
          _
      $region48: #{tpu_custom_call.1} parent=5 // pred_fallthru
        _
      %p430 = scmp.le.s32.totalorder 1, %s24
      %p431 = scmp.lt.s32.totalorder %s24, 3
      %p432 = pnand %p430, %p431
      %p433 = pneg %p432
      // Predicated region
      $region94: #{tpu_custom_call.1} parent=5 // pred_check
        _
      $region95: #{tpu_custom_call.1} parent=5 // pred_check_branch
        %435 = sbr.rel (%p432) target = $region97
      $region96: #{tpu_custom_call.1} parent=5 // pred_region
        %s436 = ssub.s32 %s24, 1
        %s437 = sand.u32 %s98, 1
        %s438 = sand.u32 %s98, 1
        %s439 = smul.addr %s438, 16
        %s440 = scalar_lea.vmem [#allocation5], %s439
        // Predicated region
        $region98: #{tpu_custom_call.1} parent=96 // pred_check
          %p441 = pneg %p111
        $region99: #{tpu_custom_call.1} parent=96 // pred_check_branch
          %443 = sbr.rel (%p441) target = $region101
        $region100: #{tpu_custom_call.1} parent=96 // pred_region
          _
        $region101: #{tpu_custom_call.1} parent=96 // pred_fallthru
          _
        %s444 = smul.u32 16, %s34
        %p445 = scmp.lt.s32.totalorder %s33, 0
        %s446 = scalar_select %p445, %s33, 0
        %p447 = scmp.lt.s32.totalorder %s444, 31
        %s448 = scalar_select %p447, %s444, 31
        %s449 = smul.addr %s446, 32
        %s450 = sadd.s32 %s448, %s449
        %s451 = smul.addr %s450, 4
        %s452 = scalar_lea.vmem %s1, %s451
        %p453 = pneg %p64
        %p454 = pneg %p61
        %p455 = pneg %p85
        %p456 = pneg %p82
        %s457 = sand.u32 %s98, 1
        %s458 = sand.u32 %s98, 1
        %s459 = smul.addr %s458, 16
        %s460 = scalar_lea.vmem [#allocation5], %s459
        %p461 = pneg %p111
        %p462 = pneg %p108
        %p463 = pneg %p132
        %p464 = pneg %p129
        %p465 = pneg %p153
        %p466 = pneg %p150
        %p467 = pneg %p174
        %p468 = pneg %p171
        %p469 = pneg %p195
        %p470 = pneg %p192
        %p471 = pneg %p216
        %p472 = pneg %p213
        %p473 = pneg %p237
        %p474 = pneg %p234
        %p475 = pneg %p258
        %p476 = pneg %p255
        %p477 = pneg %p286
        %p478 = pneg %p283
        %s479 = sand.u32 %s273, 1
        %s480 = scalar_lea.sflag [#allocation7], %s479
        %s481 = sand.u32 %s273, 1
        %s482 = smul.addr %s481, 128
        %s483 = scalar_lea.vmem [#allocation6], %s482
        %p484 = pneg %p312
        %p485 = pneg %p309
        %s486 = smul.u32 16, %s34
        %p487 = scmp.lt.s32.totalorder %s33, 0
        %s488 = scalar_select %p487, %s33, 0
        %p489 = scmp.lt.s32.totalorder %s486, 31
        %s490 = scalar_select %p489, %s486, 31
        %s491 = smul.addr %s488, 32
        %s492 = sadd.s32 %s490, %s491
        %s493 = smul.addr %s492, 4
        %s494 = scalar_lea.vmem %s1, %s493
        %s495 = smul.u32 16, %s34
        %v497 = vld [vmem:[%s494] sm:$0xf]
        %v498 = vld [vmem:[%s494 + $0x4] sm:$0xf]
        %v499 = vld [vmem:[%s494 + $0x8] sm:$0xf]
        %v500 = vld [vmem:[%s494 + $0xc] sm:$0xf]
        %v501 = vld [vmem:[%s494 + $0x10] sm:$0xf]
        %v502 = vld [vmem:[%s494 + $0x14] sm:$0xf]
        %v503 = vld [vmem:[%s494 + $0x18] sm:$0xf]
        %v504 = vld [vmem:[%s494 + $0x1c] sm:$0xf]
        %v505 = vld [vmem:[%s494 + $0x20] sm:$0xf]
        %v506 = vld [vmem:[%s494 + $0x24] sm:$0xf]
        %v507 = vld [vmem:[%s494 + $0x28] sm:$0xf]
        %v508 = vld [vmem:[%s494 + $0x2c] sm:$0xf]
        %v509 = vld [vmem:[%s494 + $0x30] sm:$0xf]
        %v510 = vld [vmem:[%s494 + $0x34] sm:$0xf]
        %v511 = vld [vmem:[%s494 + $0x38] sm:$0xf]
        %v512 = vld [vmem:[%s494 + $0x3c] sm:$0xf]
        %v513 = vld [vmem:[%s2] sm:$0x3]
        %v530 = vunpack.c.l.b16 %v497
        %v531 = vunpack.c.l.b16 %v498
        %v532 = vunpack.c.l.b16 %v499
        %v533 = vunpack.c.l.b16 %v500
        %v534 = vunpack.c.l.b16 %v501
        %v535 = vunpack.c.l.b16 %v502
        %v536 = vunpack.c.l.b16 %v503
        %v537 = vunpack.c.l.b16 %v504
        %v538 = vunpack.c.l.b16 %v505
        %v539 = vunpack.c.l.b16 %v506
        %v540 = vunpack.c.l.b16 %v507
        %v541 = vunpack.c.l.b16 %v508
        %v542 = vunpack.c.l.b16 %v509
        %v543 = vunpack.c.l.b16 %v510
        %v544 = vunpack.c.l.b16 %v511
        %v545 = vunpack.c.l.b16 %v512
        %v546 = vpack.c.b16 %v531, %v530
        %v547 = vpack.c.b16 %v533, %v532
        %v548 = vpack.c.b16 %v535, %v534
        %v549 = vpack.c.b16 %v537, %v536
        %v550 = vpack.c.b16 %v539, %v538
        %v551 = vpack.c.b16 %v541, %v540
        %v552 = vpack.c.b16 %v543, %v542
        %v553 = vpack.c.b16 %v545, %v544
        %562 = vmatpush.bf16.xpose.msra.mxu0 0
        %563 = vmatpush.bf16.xpose.msra.mxu0 0
        %564 = vmatpush.bf16.xpose.msra.mxu0 0
        %565 = vmatpush.bf16.xpose.msra.mxu0 0
        %566 = vmatpush.bf16.xpose.msra.mxu0 0
        %567 = vmatpush.bf16.xpose.msra.mxu0 0
        %568 = vmatpush.bf16.xpose.msra.mxu0 0
        %569 = vmatpush.bf16.xpose.msra.mxu0 %v513
        %570 = vmatmul.bf16.gmra.mxu0 %v546
        %v571 = vpop.f32.mrf.mxu0
        %v572 = vadd.f32 0.0, %v571
        %v573 = vpop.f32.mrf.mxu0
        %v574 = vadd.f32 0.0, %v573
        %575 = vmatmul.bf16.gmra.mxu0 %v547
        %v576 = vpop.f32.mrf.mxu0
        %v577 = vadd.f32 0.0, %v576
        %v578 = vpop.f32.mrf.mxu0
        %v579 = vadd.f32 0.0, %v578
        %580 = vmatmul.bf16.gmra.mxu0 %v548
        %v581 = vpop.f32.mrf.mxu0
        %v582 = vadd.f32 0.0, %v581
        %v583 = vpop.f32.mrf.mxu0
        %v584 = vadd.f32 0.0, %v583
        %585 = vmatmul.bf16.gmra.mxu0 %v549
        %v586 = vpop.f32.mrf.mxu0
        %v587 = vadd.f32 0.0, %v586
        %v588 = vpop.f32.mrf.mxu0
        %v589 = vadd.f32 0.0, %v588
        %590 = vmatmul.bf16.gmra.mxu0 %v550
        %v591 = vpop.f32.mrf.mxu0
        %v592 = vadd.f32 0.0, %v591
        %v593 = vpop.f32.mrf.mxu0
        %v594 = vadd.f32 0.0, %v593
        %595 = vmatmul.bf16.gmra.mxu0 %v551
        %v596 = vpop.f32.mrf.mxu0
        %v597 = vadd.f32 0.0, %v596
        %v598 = vpop.f32.mrf.mxu0
        %v599 = vadd.f32 0.0, %v598
        %600 = vmatmul.bf16.gmra.mxu0 %v552
        %v601 = vpop.f32.mrf.mxu0
        %v602 = vadd.f32 0.0, %v601
        %v603 = vpop.f32.mrf.mxu0
        %v604 = vadd.f32 0.0, %v603
        %605 = vmatmul.bf16.gmra.mxu0 %v553
        %v606 = vpop.f32.mrf.mxu0
        %v607 = vadd.f32 0.0, %v606
        %v608 = vpop.f32.mrf.mxu0
        %v609 = vadd.f32 0.0, %v608
        %610 = vdwg.mxu0
        %p611 = scmp.eq.s32.totalorder %s34, 0
        // Predicated region
        $region102: #{tpu_custom_call.1} parent=96 // pred_check
          %p612 = pneg %p611
        $region103: #{tpu_custom_call.1} parent=96 // pred_check_branch
          %614 = sbr.rel (%p612) target = $region105
        $region104: #{tpu_custom_call.1} parent=96 // pred_region
          %615 = vst [vmem:[#allocation2] sm:$0xff] 0.0
          %616 = vst [vmem:[#allocation2 + $0x8] sm:$0xff] 0.0
          %617 = vst [vmem:[#allocation2 + $0x10] sm:$0xff] 0.0
          %618 = vst [vmem:[#allocation2 + $0x18] sm:$0xff] 0.0
          %619 = vst [vmem:[#allocation2 + $0x20] sm:$0xff] 0.0
          %620 = vst [vmem:[#allocation2 + $0x28] sm:$0xff] 0.0
          %621 = vst [vmem:[#allocation2 + $0x30] sm:$0xff] 0.0
          %622 = vst [vmem:[#allocation2 + $0x38] sm:$0xff] 0.0
          %623 = vst [vmem:[#allocation2 + $0x40] sm:$0xff] 0.0
          %624 = vst [vmem:[#allocation2 + $0x48] sm:$0xff] 0.0
          %625 = vst [vmem:[#allocation2 + $0x50] sm:$0xff] 0.0
          %626 = vst [vmem:[#allocation2 + $0x58] sm:$0xff] 0.0
          %627 = vst [vmem:[#allocation2 + $0x60] sm:$0xff] 0.0
          %628 = vst [vmem:[#allocation2 + $0x68] sm:$0xff] 0.0
          %629 = vst [vmem:[#allocation2 + $0x70] sm:$0xff] 0.0
          %630 = vst [vmem:[#allocation2 + $0x78] sm:$0xff] 0.0
        $region105: #{tpu_custom_call.1} parent=96 // pred_fallthru
          _
        %v631 = vld [vmem:[%s440] sm:$0xf]
        %v632 = vld [vmem:[%s440 + $0x4] sm:$0xf]
        %v633 = vld [vmem:[%s440 + $0x8] sm:$0xf]
        %v634 = vld [vmem:[%s440 + $0xc] sm:$0xf]
        %v635 = vunpack.c.l.bf16 %v631
        %v636 = vunpack.c.l.bf16 %v632
        %v637 = vunpack.c.l.bf16 %v633
        %v638 = vunpack.c.l.bf16 %v634
        %639 = vmatpush.bf16.xpose.msra.mxu0 %v553
        %640 = vmatpush.bf16.xpose.msra.mxu0 %v552
        %641 = vmatpush.bf16.xpose.msra.mxu0 %v551
        %642 = vmatpush.bf16.xpose.msra.mxu0 %v550
        %643 = vmatpush.bf16.xpose.msra.mxu0 %v549
        %644 = vmatpush.bf16.xpose.msra.mxu0 %v548
        %645 = vmatpush.bf16.xpose.msra.mxu0 %v547
        %646 = vmatpush.bf16.xpose.msra.mxu0 %v546
        %647 = vmatmul.bf16.gmra.mxu0 %v513
        %v648 = vpop.f32.mrf.mxu0
        %v649 = vadd.f32 1.0, %v648
        %v650 = vpop.f32.mrf.mxu0
        %651 = vdwg.mxu0
        %v653 = vrot.slane %v649, 1
        %v654 = vrot.slane %v649, 2
        %v655 = vrot.slane %v649, 3
        %v656 = vperm.slane %v649, 0
        %v657 = vperm.slane %v653, 0
        %v658 = vperm.slane %v654, 0
        %v659 = vperm.slane %v655, 0
        %v664 = vmul.f32 %v656, %v635
        %v665 = vmul.f32 %v656, %v636
        %v666 = vmul.f32 %v656, %v637
        %v667 = vmul.f32 %v656, %v638
        %v668 = vmul.f32 %v657, %v635
        %v669 = vmul.f32 %v657, %v636
        %v670 = vmul.f32 %v657, %v637
        %v671 = vmul.f32 %v657, %v638
        %v672 = vmul.f32 %v658, %v635
        %v673 = vmul.f32 %v658, %v636
        %v674 = vmul.f32 %v658, %v637
        %v675 = vmul.f32 %v658, %v638
        %v676 = vmul.f32 %v659, %v635
        %v677 = vmul.f32 %v659, %v636
        %v678 = vmul.f32 %v659, %v637
        %v679 = vmul.f32 %v659, %v638
        %v680 = vpack.c.bf16 %v665, %v664
        %v681 = vpack.c.bf16 %v667, %v666
        %v682 = vpack.c.bf16 %v669, %v668
        %v683 = vpack.c.bf16 %v671, %v670
        %v684 = vpack.c.bf16 %v673, %v672
        %v685 = vpack.c.bf16 %v675, %v674
        %v686 = vpack.c.bf16 %v677, %v676
        %v687 = vpack.c.bf16 %v679, %v678
        %v688 = vld [vmem:[#allocation2] sm:$0xff]
        %v689 = vld [vmem:[#allocation2 + $0x8] sm:$0xff]
        %v690 = vld [vmem:[#allocation2 + $0x10] sm:$0xff]
        %v691 = vld [vmem:[#allocation2 + $0x18] sm:$0xff]
        %v692 = vld [vmem:[#allocation2 + $0x20] sm:$0xff]
        %v693 = vld [vmem:[#allocation2 + $0x28] sm:$0xff]
        %v694 = vld [vmem:[#allocation2 + $0x30] sm:$0xff]
        %v695 = vld [vmem:[#allocation2 + $0x38] sm:$0xff]
        %v696 = vld [vmem:[#allocation2 + $0x40] sm:$0xff]
        %v697 = vld [vmem:[#allocation2 + $0x48] sm:$0xff]
        %v698 = vld [vmem:[#allocation2 + $0x50] sm:$0xff]
        %v699 = vld [vmem:[#allocation2 + $0x58] sm:$0xff]
        %v700 = vld [vmem:[#allocation2 + $0x60] sm:$0xff]
        %v701 = vld [vmem:[#allocation2 + $0x68] sm:$0xff]
        %v702 = vld [vmem:[#allocation2 + $0x70] sm:$0xff]
        %v703 = vld [vmem:[#allocation2 + $0x78] sm:$0xff]
        %704 = vmatpush.bf16.msra.mxu0 %v553
        %705 = vmatpush.bf16.msra.mxu0 %v552
        %706 = vmatpush.bf16.msra.mxu0 %v551
        %707 = vmatpush.bf16.msra.mxu0 %v550
        %708 = vmatpush.bf16.msra.mxu0 %v549
        %709 = vmatpush.bf16.msra.mxu0 %v548
        %710 = vmatpush.bf16.msra.mxu0 %v547
        %711 = vmatpush.bf16.msra.mxu0 %v546
        %712 = vmatmul.bf16.gmra.mxu0 %v680
        %v713 = vpop.f32.mrf.mxu0
        %v714 = vadd.f32 0.0, %v713
        %v715 = vpop.f32.mrf.mxu0
        %v716 = vadd.f32 0.0, %v715
        %717 = vmatmul.bf16.gmra.mxu0 %v681
        %v718 = vpop.f32.mrf.mxu0
        %v719 = vadd.f32 0.0, %v718
        %v720 = vpop.f32.mrf.mxu0
        %v721 = vadd.f32 0.0, %v720
        %722 = vmatmul.bf16.gmra.mxu0 %v682
        %v723 = vpop.f32.mrf.mxu0
        %v724 = vadd.f32 0.0, %v723
        %v725 = vpop.f32.mrf.mxu0
        %v726 = vadd.f32 0.0, %v725
        %727 = vmatmul.bf16.gmra.mxu0 %v683
        %v728 = vpop.f32.mrf.mxu0
        %v729 = vadd.f32 0.0, %v728
        %v730 = vpop.f32.mrf.mxu0
        %v731 = vadd.f32 0.0, %v730
        %732 = vmatmul.bf16.gmra.mxu0 %v684
        %v733 = vpop.f32.mrf.mxu0
        %v734 = vadd.f32 0.0, %v733
        %v735 = vpop.f32.mrf.mxu0
        %v736 = vadd.f32 0.0, %v735
        %737 = vmatmul.bf16.gmra.mxu0 %v685
        %v738 = vpop.f32.mrf.mxu0
        %v739 = vadd.f32 0.0, %v738
        %v740 = vpop.f32.mrf.mxu0
        %v741 = vadd.f32 0.0, %v740
        %742 = vmatmul.bf16.gmra.mxu0 %v686
        %v743 = vpop.f32.mrf.mxu0
        %v744 = vadd.f32 0.0, %v743
        %v745 = vpop.f32.mrf.mxu0
        %v746 = vadd.f32 0.0, %v745
        %747 = vmatmul.bf16.gmra.mxu0 %v687
        %v748 = vpop.f32.mrf.mxu0
        %v749 = vadd.f32 0.0, %v748
        %v750 = vpop.f32.mrf.mxu0
        %v751 = vadd.f32 0.0, %v750
        %752 = vdwg.mxu0
        %v753 = vadd.f32 %v688, %v714
        %v754 = vadd.f32 %v689, %v716
        %v755 = vadd.f32 %v690, %v719
        %v756 = vadd.f32 %v691, %v721
        %v757 = vadd.f32 %v692, %v724
        %v758 = vadd.f32 %v693, %v726
        %v759 = vadd.f32 %v694, %v729
        %v760 = vadd.f32 %v695, %v731
        %v761 = vadd.f32 %v696, %v734
        %v762 = vadd.f32 %v697, %v736
        %v763 = vadd.f32 %v698, %v739
        %v764 = vadd.f32 %v699, %v741
        %v765 = vadd.f32 %v700, %v744
        %v766 = vadd.f32 %v701, %v746
        %v767 = vadd.f32 %v702, %v749
        %v768 = vadd.f32 %v703, %v751
        %769 = vst [vmem:[#allocation2] sm:$0xff] %v753
        %770 = vst [vmem:[#allocation2 + $0x8] sm:$0xff] %v754
        %771 = vst [vmem:[#allocation2 + $0x10] sm:$0xff] %v755
        %772 = vst [vmem:[#allocation2 + $0x18] sm:$0xff] %v756
        %773 = vst [vmem:[#allocation2 + $0x20] sm:$0xff] %v757
        %774 = vst [vmem:[#allocation2 + $0x28] sm:$0xff] %v758
        %775 = vst [vmem:[#allocation2 + $0x30] sm:$0xff] %v759
        %776 = vst [vmem:[#allocation2 + $0x38] sm:$0xff] %v760
        %777 = vst [vmem:[#allocation2 + $0x40] sm:$0xff] %v761
        %778 = vst [vmem:[#allocation2 + $0x48] sm:$0xff] %v762
        %779 = vst [vmem:[#allocation2 + $0x50] sm:$0xff] %v763
        %780 = vst [vmem:[#allocation2 + $0x58] sm:$0xff] %v764
        %781 = vst [vmem:[#allocation2 + $0x60] sm:$0xff] %v765
        %782 = vst [vmem:[#allocation2 + $0x68] sm:$0xff] %v766
        %783 = vst [vmem:[#allocation2 + $0x70] sm:$0xff] %v767
        %784 = vst [vmem:[#allocation2 + $0x78] sm:$0xff] %v768
        %p785 = scmp.eq.s32.totalorder %s34, 1
        // Predicated region
        $region106: #{tpu_custom_call.1} parent=96 // pred_check
          %p786 = pneg %p785
        $region107: #{tpu_custom_call.1} parent=96 // pred_check_branch
          %788 = sbr.rel (%p786) target = $region109
        $region108: #{tpu_custom_call.1} parent=96 // pred_region
          %v789 = vld [vmem:[#allocation2] sm:$0xff]
          %v790 = vld [vmem:[#allocation2 + $0x8] sm:$0xff]
          %v791 = vld [vmem:[#allocation2 + $0x10] sm:$0xff]
          %v792 = vld [vmem:[#allocation2 + $0x18] sm:$0xff]
          %v793 = vld [vmem:[#allocation2 + $0x20] sm:$0xff]
          %v794 = vld [vmem:[#allocation2 + $0x28] sm:$0xff]
          %v795 = vld [vmem:[#allocation2 + $0x30] sm:$0xff]
          %v796 = vld [vmem:[#allocation2 + $0x38] sm:$0xff]
          %v797 = vld [vmem:[#allocation2 + $0x40] sm:$0xff]
          %v798 = vld [vmem:[#allocation2 + $0x48] sm:$0xff]
          %v799 = vld [vmem:[#allocation2 + $0x50] sm:$0xff]
          %v800 = vld [vmem:[#allocation2 + $0x58] sm:$0xff]
          %v801 = vld [vmem:[#allocation2 + $0x60] sm:$0xff]
          %v802 = vld [vmem:[#allocation2 + $0x68] sm:$0xff]
          %v803 = vld [vmem:[#allocation2 + $0x70] sm:$0xff]
          %v804 = vld [vmem:[#allocation2 + $0x78] sm:$0xff]
          %v805 = vld [vmem:[%s4] sm:$0xff]
          %v806 = vld [vmem:[%s4 + $0x8] sm:$0xff]
          %v807 = vld [vmem:[%s4 + $0x10] sm:$0xff]
          %v808 = vld [vmem:[%s4 + $0x18] sm:$0xff]
          %v809 = vld [vmem:[%s4 + $0x20] sm:$0xff]
          %v810 = vld [vmem:[%s4 + $0x28] sm:$0xff]
          %v811 = vld [vmem:[%s4 + $0x30] sm:$0xff]
          %v812 = vld [vmem:[%s4 + $0x38] sm:$0xff]
          %v813 = vld [vmem:[%s4 + $0x40] sm:$0xff]
          %v814 = vld [vmem:[%s4 + $0x48] sm:$0xff]
          %v815 = vld [vmem:[%s4 + $0x50] sm:$0xff]
          %v816 = vld [vmem:[%s4 + $0x58] sm:$0xff]
          %v817 = vld [vmem:[%s4 + $0x60] sm:$0xff]
          %v818 = vld [vmem:[%s4 + $0x68] sm:$0xff]
          %v819 = vld [vmem:[%s4 + $0x70] sm:$0xff]
          %v820 = vld [vmem:[%s4 + $0x78] sm:$0xff]
          %822 = vset.pattern.permute.xlu0 0
          %823 = vperm.xlu0 %822, %v805
          %v824 = vpop.permute.xlu0 %823
          %827 = vset.pattern.permute.xlu0 0
          %828 = vperm.xlu0 %827, %v806
          %v829 = vpop.permute.xlu0 %828
          %832 = vset.pattern.permute.xlu0 0
          %833 = vperm.xlu0 %832, %v807
          %v834 = vpop.permute.xlu0 %833
          %837 = vset.pattern.permute.xlu0 0
          %838 = vperm.xlu0 %837, %v808
          %v839 = vpop.permute.xlu0 %838
          %842 = vset.pattern.permute.xlu0 0
          %843 = vperm.xlu0 %842, %v809
          %v844 = vpop.permute.xlu0 %843
          %847 = vset.pattern.permute.xlu0 0
          %848 = vperm.xlu0 %847, %v810
          %v849 = vpop.permute.xlu0 %848
          %852 = vset.pattern.permute.xlu0 0
          %853 = vperm.xlu0 %852, %v811
          %v854 = vpop.permute.xlu0 %853
          %857 = vset.pattern.permute.xlu0 0
          %858 = vperm.xlu0 %857, %v812
          %v859 = vpop.permute.xlu0 %858
          %862 = vset.pattern.permute.xlu0 0
          %863 = vperm.xlu0 %862, %v813
          %v864 = vpop.permute.xlu0 %863
          %867 = vset.pattern.permute.xlu0 0
          %868 = vperm.xlu0 %867, %v814
          %v869 = vpop.permute.xlu0 %868
          %872 = vset.pattern.permute.xlu0 0
          %873 = vperm.xlu0 %872, %v815
          %v874 = vpop.permute.xlu0 %873
          %877 = vset.pattern.permute.xlu0 0
          %878 = vperm.xlu0 %877, %v816
          %v879 = vpop.permute.xlu0 %878
          %882 = vset.pattern.permute.xlu0 0
          %883 = vperm.xlu0 %882, %v817
          %v884 = vpop.permute.xlu0 %883
          %887 = vset.pattern.permute.xlu0 0
          %888 = vperm.xlu0 %887, %v818
          %v889 = vpop.permute.xlu0 %888
          %892 = vset.pattern.permute.xlu0 0
          %893 = vperm.xlu0 %892, %v819
          %v894 = vpop.permute.xlu0 %893
          %897 = vset.pattern.permute.xlu0 0
          %898 = vperm.xlu0 %897, %v820
          %v899 = vpop.permute.xlu0 %898
          %v901 = vadd.f32 %v789, %v824
          %v902 = vadd.f32 %v790, %v829
          %v903 = vadd.f32 %v791, %v834
          %v904 = vadd.f32 %v792, %v839
          %v905 = vadd.f32 %v793, %v844
          %v906 = vadd.f32 %v794, %v849
          %v907 = vadd.f32 %v795, %v854
          %v908 = vadd.f32 %v796, %v859
          %v909 = vadd.f32 %v797, %v864
          %v910 = vadd.f32 %v798, %v869
          %v911 = vadd.f32 %v799, %v874
          %v912 = vadd.f32 %v800, %v879
          %v913 = vadd.f32 %v801, %v884
          %v914 = vadd.f32 %v802, %v889
          %v915 = vadd.f32 %v803, %v894
          %v916 = vadd.f32 %v804, %v899
          %v917 = vmax.f32 %v901, 0.0
          %v918 = vmax.f32 %v902, 0.0
          %v919 = vmax.f32 %v903, 0.0
          %v920 = vmax.f32 %v904, 0.0
          %v921 = vmax.f32 %v905, 0.0
          %v922 = vmax.f32 %v906, 0.0
          %v923 = vmax.f32 %v907, 0.0
          %v924 = vmax.f32 %v908, 0.0
          %v925 = vmax.f32 %v909, 0.0
          %v926 = vmax.f32 %v910, 0.0
          %v927 = vmax.f32 %v911, 0.0
          %v928 = vmax.f32 %v912, 0.0
          %v929 = vmax.f32 %v913, 0.0
          %v930 = vmax.f32 %v914, 0.0
          %v931 = vmax.f32 %v915, 0.0
          %v932 = vmax.f32 %v916, 0.0
          %v933 = vld [vmem:[%s5] sm:$0xf]
          %v934 = vld [vmem:[%s5 + $0x4] sm:$0xf]
          %v935 = vld [vmem:[%s5 + $0x8] sm:$0xf]
          %v936 = vld [vmem:[%s5 + $0xc] sm:$0xf]
          %v937 = vpack.c.bf16 %v918, %v917
          %v938 = vpack.c.bf16 %v920, %v919
          %v939 = vpack.c.bf16 %v922, %v921
          %v940 = vpack.c.bf16 %v924, %v923
          %v941 = vpack.c.bf16 %v926, %v925
          %v942 = vpack.c.bf16 %v928, %v927
          %v943 = vpack.c.bf16 %v930, %v929
          %v944 = vpack.c.bf16 %v932, %v931
          %v945 = vld [vmem:[%s6] sm:$0xff]
          %v946 = vld [vmem:[%s6 + $0x8] sm:$0xff]
          %v947 = vld [vmem:[%s6 + $0x10] sm:$0xff]
          %v948 = vld [vmem:[%s6 + $0x18] sm:$0xff]
          %950 = vset.pattern.permute.xlu0 0
          %951 = vperm.xlu0 %950, %v945
          %v952 = vpop.permute.xlu0 %951
          %955 = vset.pattern.permute.xlu0 0
          %956 = vperm.xlu0 %955, %v946
          %v957 = vpop.permute.xlu0 %956
          %960 = vset.pattern.permute.xlu0 0
          %961 = vperm.xlu0 %960, %v947
          %v962 = vpop.permute.xlu0 %961
          %965 = vset.pattern.permute.xlu0 0
          %966 = vperm.xlu0 %965, %v948
          %v967 = vpop.permute.xlu0 %966
          %v973 = vunpack.c.l.b16 %v933
          %v974 = vunpack.c.l.b16 %v934
          %v975 = vunpack.c.l.b16 %v935
          %v976 = vunpack.c.l.b16 %v936
          %v977 = vpack.c.b16 %v974, %v973
          %v978 = vpack.c.b16 %v976, %v975
          %981 = vmatpush.bf16.msra.mxu0 %v944
          %982 = vmatpush.bf16.msra.mxu0 %v943
          %983 = vmatpush.bf16.msra.mxu0 %v942
          %984 = vmatpush.bf16.msra.mxu0 %v941
          %985 = vmatpush.bf16.msra.mxu0 %v940
          %986 = vmatpush.bf16.msra.mxu0 %v939
          %987 = vmatpush.bf16.msra.mxu0 %v938
          %988 = vmatpush.bf16.msra.mxu0 %v937
          %989 = vmatmul.bf16.gmra.mxu0 %v977
          %v990 = vpop.f32.mrf.mxu0
          %v991 = vadd.f32 %v952, %v990
          %v992 = vpop.f32.mrf.mxu0
          %v993 = vadd.f32 %v957, %v992
          %994 = vmatmul.bf16.gmra.mxu0 %v978
          %v995 = vpop.f32.mrf.mxu0
          %v996 = vadd.f32 %v962, %v995
          %v997 = vpop.f32.mrf.mxu0
          %v998 = vadd.f32 %v967, %v997
          %999 = vdwg.mxu0
          %1000 = vst [vmem:[#allocation8] sm:$0xff] %v991
          %1001 = vst [vmem:[#allocation8 + $0x8] sm:$0xff] %v993
          %1002 = vst [vmem:[#allocation8 + $0x10] sm:$0xff] %v996
          %1003 = vst [vmem:[#allocation8 + $0x18] sm:$0xff] %v998
        $region109: #{tpu_custom_call.1} parent=96 // pred_fallthru
          _
        %s1004 = sld [smem:[#allocation4 + %s33]]
        %s1005 = ssub.s32 %s1004, 1
        %v1006 = vlaneseq
        %v1007 = vand.u32 %v1006, 127
        %v1008 = vstv %s1005
        %vm1009 = vcmp.eq.s32.totalorder %v1007, %v1008
        %v1010 = vsel %vm1009, %v572, 0.0
        %v1011 = vsel %vm1009, %v574, 0.0
        %v1012 = vsel %vm1009, %v577, 0.0
        %v1013 = vsel %vm1009, %v579, 0.0
        %v1014 = vsel %vm1009, %v582, 0.0
        %v1015 = vsel %vm1009, %v584, 0.0
        %v1016 = vsel %vm1009, %v587, 0.0
        %v1017 = vsel %vm1009, %v589, 0.0
        %v1018 = vsel %vm1009, %v592, 0.0
        %v1019 = vsel %vm1009, %v594, 0.0
        %v1020 = vsel %vm1009, %v597, 0.0
        %v1021 = vsel %vm1009, %v599, 0.0
        %v1022 = vsel %vm1009, %v602, 0.0
        %v1023 = vsel %vm1009, %v604, 0.0
        %v1024 = vsel %vm1009, %v607, 0.0
        %v1025 = vsel %vm1009, %v609, 0.0
        %vm1026 = vcmask 31744
        %v1027 = vsel %vm1026, %v1010, 0.0
        %1028 = vadd.xlane.f32.xlu0 %v1027
        %v1029 = vpop.xlane.xlu0 %1028
        %v1030 = vsel %vm1026, %v1011, 0.0
        %1031 = vadd.xlane.f32.xlu0 %v1030
        %v1032 = vpop.xlane.xlu0 %1031
        %v1033 = vsel %vm1026, %v1012, 0.0
        %1034 = vadd.xlane.f32.xlu0 %v1033
        %v1035 = vpop.xlane.xlu0 %1034
        %v1036 = vsel %vm1026, %v1013, 0.0
        %1037 = vadd.xlane.f32.xlu0 %v1036
        %v1038 = vpop.xlane.xlu0 %1037
        %v1039 = vsel %vm1026, %v1014, 0.0
        %1040 = vadd.xlane.f32.xlu0 %v1039
        %v1041 = vpop.xlane.xlu0 %1040
        %v1042 = vsel %vm1026, %v1015, 0.0
        %1043 = vadd.xlane.f32.xlu0 %v1042
        %v1044 = vpop.xlane.xlu0 %1043
        %v1045 = vsel %vm1026, %v1016, 0.0
        %1046 = vadd.xlane.f32.xlu0 %v1045
        %v1047 = vpop.xlane.xlu0 %1046
        %v1048 = vsel %vm1026, %v1017, 0.0
        %1049 = vadd.xlane.f32.xlu0 %v1048
        %v1050 = vpop.xlane.xlu0 %1049
        %v1051 = vsel %vm1026, %v1018, 0.0
        %1052 = vadd.xlane.f32.xlu0 %v1051
        %v1053 = vpop.xlane.xlu0 %1052
        %v1054 = vsel %vm1026, %v1019, 0.0
        %1055 = vadd.xlane.f32.xlu0 %v1054
        %v1056 = vpop.xlane.xlu0 %1055
        %v1057 = vsel %vm1026, %v1020, 0.0
        %1058 = vadd.xlane.f32.xlu0 %v1057
        %v1059 = vpop.xlane.xlu0 %1058
        %v1060 = vsel %vm1026, %v1021, 0.0
        %1061 = vadd.xlane.f32.xlu0 %v1060
        %v1062 = vpop.xlane.xlu0 %1061
        %v1063 = vsel %vm1026, %v1022, 0.0
        %1064 = vadd.xlane.f32.xlu0 %v1063
        %v1065 = vpop.xlane.xlu0 %1064
        %v1066 = vsel %vm1026, %v1023, 0.0
        %1067 = vadd.xlane.f32.xlu0 %v1066
        %v1068 = vpop.xlane.xlu0 %1067
        %v1069 = vsel %vm1026, %v1024, 0.0
        %1070 = vadd.xlane.f32.xlu0 %v1069
        %v1071 = vpop.xlane.xlu0 %1070
        %v1072 = vsel %vm1026, %v1025, 0.0
        %1073 = vadd.xlane.f32.xlu0 %v1072
        %v1074 = vpop.xlane.xlu0 %1073
        %v1075 = vunpack.c.l.bf16 %v497
        %v1076 = vunpack.c.l.bf16 %v498
        %v1077 = vunpack.c.l.bf16 %v499
        %v1078 = vunpack.c.l.bf16 %v500
        %v1079 = vunpack.c.l.bf16 %v501
        %v1080 = vunpack.c.l.bf16 %v502
        %v1081 = vunpack.c.l.bf16 %v503
        %v1082 = vunpack.c.l.bf16 %v504
        %v1083 = vunpack.c.l.bf16 %v505
        %v1084 = vunpack.c.l.bf16 %v506
        %v1085 = vunpack.c.l.bf16 %v507
        %v1086 = vunpack.c.l.bf16 %v508
        %v1087 = vunpack.c.l.bf16 %v509
        %v1088 = vunpack.c.l.bf16 %v510
        %v1089 = vunpack.c.l.bf16 %v511
        %v1090 = vunpack.c.l.bf16 %v512
        %v1091 = vadd.f32 %v1029, 1.0
        %v1092 = vadd.f32 %v1032, 1.0
        %v1093 = vadd.f32 %v1035, 1.0
        %v1094 = vadd.f32 %v1038, 1.0
        %v1095 = vadd.f32 %v1041, 1.0
        %v1096 = vadd.f32 %v1044, 1.0
        %v1097 = vadd.f32 %v1047, 1.0
        %v1098 = vadd.f32 %v1050, 1.0
        %v1099 = vadd.f32 %v1053, 1.0
        %v1100 = vadd.f32 %v1056, 1.0
        %v1101 = vadd.f32 %v1059, 1.0
        %v1102 = vadd.f32 %v1062, 1.0
        %v1103 = vadd.f32 %v1065, 1.0
        %v1104 = vadd.f32 %v1068, 1.0
        %v1105 = vadd.f32 %v1071, 1.0
        %v1106 = vadd.f32 %v1074, 1.0
        %v1107 = vmul.f32 %v1075, %v1091
        %v1108 = vmul.f32 %v1076, %v1092
        %v1109 = vmul.f32 %v1077, %v1093
        %v1110 = vmul.f32 %v1078, %v1094
        %v1111 = vmul.f32 %v1079, %v1095
        %v1112 = vmul.f32 %v1080, %v1096
        %v1113 = vmul.f32 %v1081, %v1097
        %v1114 = vmul.f32 %v1082, %v1098
        %v1115 = vmul.f32 %v1083, %v1099
        %v1116 = vmul.f32 %v1084, %v1100
        %v1117 = vmul.f32 %v1085, %v1101
        %v1118 = vmul.f32 %v1086, %v1102
        %v1119 = vmul.f32 %v1087, %v1103
        %v1120 = vmul.f32 %v1088, %v1104
        %v1121 = vmul.f32 %v1089, %v1105
        %v1122 = vmul.f32 %v1090, %v1106
        %v1123 = vld [vmem:[%s7] sm:$0xf]
        %v1124 = vld [vmem:[%s7 + $0x4] sm:$0xf]
        %v1125 = vld [vmem:[%s7 + $0x8] sm:$0xf]
        %v1126 = vld [vmem:[%s7 + $0xc] sm:$0xf]
        %v1127 = vpack.c.bf16 %v1108, %v1107
        %v1128 = vpack.c.bf16 %v1110, %v1109
        %v1129 = vpack.c.bf16 %v1112, %v1111
        %v1130 = vpack.c.bf16 %v1114, %v1113
        %v1131 = vpack.c.bf16 %v1116, %v1115
        %v1132 = vpack.c.bf16 %v1118, %v1117
        %v1133 = vpack.c.bf16 %v1120, %v1119
        %v1134 = vpack.c.bf16 %v1122, %v1121
        %v1135 = vld [vmem:[%s8] sm:$0xff]
        %v1136 = vld [vmem:[%s8 + $0x8] sm:$0xff]
        %v1137 = vld [vmem:[%s8 + $0x10] sm:$0xff]
        %v1138 = vld [vmem:[%s8 + $0x18] sm:$0xff]
        %1140 = vset.pattern.permute.xlu0 0
        %1141 = vperm.xlu0 %1140, %v1135
        %v1142 = vpop.permute.xlu0 %1141
        %1145 = vset.pattern.permute.xlu0 0
        %1146 = vperm.xlu0 %1145, %v1136
        %v1147 = vpop.permute.xlu0 %1146
        %1150 = vset.pattern.permute.xlu0 0
        %1151 = vperm.xlu0 %1150, %v1137
        %v1152 = vpop.permute.xlu0 %1151
        %1155 = vset.pattern.permute.xlu0 0
        %1156 = vperm.xlu0 %1155, %v1138
        %v1157 = vpop.permute.xlu0 %1156
        %v1163 = vunpack.c.l.b16 %v1123
        %v1164 = vunpack.c.l.b16 %v1124
        %v1165 = vunpack.c.l.b16 %v1125
        %v1166 = vunpack.c.l.b16 %v1126
        %v1167 = vpack.c.b16 %v1164, %v1163
        %v1168 = vpack.c.b16 %v1166, %v1165
        %1171 = vmatpush.bf16.xpose.msra.mxu0 %v1134
        %1172 = vmatpush.bf16.xpose.msra.mxu0 %v1133
        %1173 = vmatpush.bf16.xpose.msra.mxu0 %v1132
        %1174 = vmatpush.bf16.xpose.msra.mxu0 %v1131
        %1175 = vmatpush.bf16.xpose.msra.mxu0 %v1130
        %1176 = vmatpush.bf16.xpose.msra.mxu0 %v1129
        %1177 = vmatpush.bf16.xpose.msra.mxu0 %v1128
        %1178 = vmatpush.bf16.xpose.msra.mxu0 %v1127
        %1179 = vmatmul.bf16.gmra.mxu0 %v1167
        %v1180 = vpop.f32.mrf.mxu0
        %v1181 = vadd.f32 %v1142, %v1180
        %v1182 = vpop.f32.mrf.mxu0
        %v1183 = vadd.f32 %v1147, %v1182
        %1184 = vmatmul.bf16.gmra.mxu0 %v1168
        %v1185 = vpop.f32.mrf.mxu0
        %v1186 = vadd.f32 %v1152, %v1185
        %v1187 = vpop.f32.mrf.mxu0
        %v1188 = vadd.f32 %v1157, %v1187
        %1189 = vdwg.mxu0
        %v1190 = vmax.f32 %v1181, 0.0
        %v1191 = vmax.f32 %v1183, 0.0
        %v1192 = vmax.f32 %v1186, 0.0
        %v1193 = vmax.f32 %v1188, 0.0
        %v1194 = vld [vmem:[%s9] sm:$0xf]
        %v1195 = vld [vmem:[%s9 + $0x4] sm:$0xf]
        %v1196 = vld [vmem:[%s9 + $0x8] sm:$0xf]
        %v1197 = vld [vmem:[%s9 + $0xc] sm:$0xf]
        %v1198 = vld [vmem:[%s9 + $0x10] sm:$0xf]
        %v1199 = vld [vmem:[%s9 + $0x14] sm:$0xf]
        %v1200 = vld [vmem:[%s9 + $0x18] sm:$0xf]
        %v1201 = vld [vmem:[%s9 + $0x1c] sm:$0xf]
        %v1202 = vld [vmem:[%s9 + $0x20] sm:$0xf]
        %v1203 = vld [vmem:[%s9 + $0x24] sm:$0xf]
        %v1204 = vld [vmem:[%s9 + $0x28] sm:$0xf]
        %v1205 = vld [vmem:[%s9 + $0x2c] sm:$0xf]
        %v1206 = vld [vmem:[%s9 + $0x30] sm:$0xf]
        %v1207 = vld [vmem:[%s9 + $0x34] sm:$0xf]
        %v1208 = vld [vmem:[%s9 + $0x38] sm:$0xf]
        %v1209 = vld [vmem:[%s9 + $0x3c] sm:$0xf]
        %v1210 = vpack.c.bf16 %v1191, %v1190
        %v1211 = vpack.c.bf16 %v1193, %v1192
        %v1212 = vld [vmem:[%s10] sm:$0xff]
        %v1213 = vld [vmem:[%s10 + $0x8] sm:$0xff]
        %v1214 = vld [vmem:[%s10 + $0x10] sm:$0xff]
        %v1215 = vld [vmem:[%s10 + $0x18] sm:$0xff]
        %v1216 = vld [vmem:[%s10 + $0x20] sm:$0xff]
        %v1217 = vld [vmem:[%s10 + $0x28] sm:$0xff]
        %v1218 = vld [vmem:[%s10 + $0x30] sm:$0xff]
        %v1219 = vld [vmem:[%s10 + $0x38] sm:$0xff]
        %v1220 = vld [vmem:[%s10 + $0x40] sm:$0xff]
        %v1221 = vld [vmem:[%s10 + $0x48] sm:$0xff]
        %v1222 = vld [vmem:[%s10 + $0x50] sm:$0xff]
        %v1223 = vld [vmem:[%s10 + $0x58] sm:$0xff]
        %v1224 = vld [vmem:[%s10 + $0x60] sm:$0xff]
        %v1225 = vld [vmem:[%s10 + $0x68] sm:$0xff]
        %v1226 = vld [vmem:[%s10 + $0x70] sm:$0xff]
        %v1227 = vld [vmem:[%s10 + $0x78] sm:$0xff]
        %1229 = vset.pattern.permute.xlu0 0
        %1230 = vperm.xlu0 %1229, %v1212
        %v1231 = vpop.permute.xlu0 %1230
        %1234 = vset.pattern.permute.xlu0 0
        %1235 = vperm.xlu0 %1234, %v1213
        %v1236 = vpop.permute.xlu0 %1235
        %1239 = vset.pattern.permute.xlu0 0
        %1240 = vperm.xlu0 %1239, %v1214
        %v1241 = vpop.permute.xlu0 %1240
        %1244 = vset.pattern.permute.xlu0 0
        %1245 = vperm.xlu0 %1244, %v1215
        %v1246 = vpop.permute.xlu0 %1245
        %1249 = vset.pattern.permute.xlu0 0
        %1250 = vperm.xlu0 %1249, %v1216
        %v1251 = vpop.permute.xlu0 %1250
        %1254 = vset.pattern.permute.xlu0 0
        %1255 = vperm.xlu0 %1254, %v1217
        %v1256 = vpop.permute.xlu0 %1255
        %1259 = vset.pattern.permute.xlu0 0
        %1260 = vperm.xlu0 %1259, %v1218
        %v1261 = vpop.permute.xlu0 %1260
        %1264 = vset.pattern.permute.xlu0 0
        %1265 = vperm.xlu0 %1264, %v1219
        %v1266 = vpop.permute.xlu0 %1265
        %1269 = vset.pattern.permute.xlu0 0
        %1270 = vperm.xlu0 %1269, %v1220
        %v1271 = vpop.permute.xlu0 %1270
        %1274 = vset.pattern.permute.xlu0 0
        %1275 = vperm.xlu0 %1274, %v1221
        %v1276 = vpop.permute.xlu0 %1275
        %1279 = vset.pattern.permute.xlu0 0
        %1280 = vperm.xlu0 %1279, %v1222
        %v1281 = vpop.permute.xlu0 %1280
        %1284 = vset.pattern.permute.xlu0 0
        %1285 = vperm.xlu0 %1284, %v1223
        %v1286 = vpop.permute.xlu0 %1285
        %1289 = vset.pattern.permute.xlu0 0
        %1290 = vperm.xlu0 %1289, %v1224
        %v1291 = vpop.permute.xlu0 %1290
        %1294 = vset.pattern.permute.xlu0 0
        %1295 = vperm.xlu0 %1294, %v1225
        %v1296 = vpop.permute.xlu0 %1295
        %1299 = vset.pattern.permute.xlu0 0
        %1300 = vperm.xlu0 %1299, %v1226
        %v1301 = vpop.permute.xlu0 %1300
        %1304 = vset.pattern.permute.xlu0 0
        %1305 = vperm.xlu0 %1304, %v1227
        %v1306 = vpop.permute.xlu0 %1305
        %v1324 = vunpack.c.l.b16 %v1194
        %v1325 = vunpack.c.l.b16 %v1195
        %v1326 = vunpack.c.l.b16 %v1196
        %v1327 = vunpack.c.l.b16 %v1197
        %v1328 = vunpack.c.l.b16 %v1198
        %v1329 = vunpack.c.l.b16 %v1199
        %v1330 = vunpack.c.l.b16 %v1200
        %v1331 = vunpack.c.l.b16 %v1201
        %v1332 = vunpack.c.l.b16 %v1202
        %v1333 = vunpack.c.l.b16 %v1203
        %v1334 = vunpack.c.l.b16 %v1204
        %v1335 = vunpack.c.l.b16 %v1205
        %v1336 = vunpack.c.l.b16 %v1206
        %v1337 = vunpack.c.l.b16 %v1207
        %v1338 = vunpack.c.l.b16 %v1208
        %v1339 = vunpack.c.l.b16 %v1209
        %v1340 = vpack.c.b16 %v1325, %v1324
        %v1341 = vpack.c.b16 %v1327, %v1326
        %v1342 = vpack.c.b16 %v1329, %v1328
        %v1343 = vpack.c.b16 %v1331, %v1330
        %v1344 = vpack.c.b16 %v1333, %v1332
        %v1345 = vpack.c.b16 %v1335, %v1334
        %v1346 = vpack.c.b16 %v1337, %v1336
        %v1347 = vpack.c.b16 %v1339, %v1338
        %vm1348 = vcmask 261120
        %v1350 = vsel %vm1348, %v1340, 0
        %v1353 = vsel %vm1348, %v1341, 0
        %v1356 = vsel %vm1348, %v1342, 0
        %v1359 = vsel %vm1348, %v1343, 0
        %v1362 = vsel %vm1348, %v1344, 0
        %v1365 = vsel %vm1348, %v1345, 0
        %v1368 = vsel %vm1348, %v1346, 0
        %v1371 = vsel %vm1348, %v1347, 0
        %1373 = vmatpush.bf16.msra.mxu0 0
        %1374 = vmatpush.bf16.msra.mxu0 0
        %1375 = vmatpush.bf16.msra.mxu0 0
        %1376 = vmatpush.bf16.msra.mxu0 0
        %1377 = vmatpush.bf16.msra.mxu0 0
        %1378 = vmatpush.bf16.msra.mxu0 0
        %1379 = vmatpush.bf16.msra.mxu0 %v1211
        %1380 = vmatpush.bf16.msra.mxu0 %v1210
        %1381 = vmatmul.bf16.gmra.mxu0 %v1350
        %v1382 = vpop.f32.mrf.mxu0
        %v1383 = vadd.f32 %v1231, %v1382
        %v1384 = vpop.f32.mrf.mxu0
        %v1385 = vadd.f32 %v1236, %v1384
        %1386 = vmatmul.bf16.gmra.mxu0 %v1353
        %v1387 = vpop.f32.mrf.mxu0
        %v1388 = vadd.f32 %v1241, %v1387
        %v1389 = vpop.f32.mrf.mxu0
        %v1390 = vadd.f32 %v1246, %v1389
        %1391 = vmatmul.bf16.gmra.mxu0 %v1356
        %v1392 = vpop.f32.mrf.mxu0
        %v1393 = vadd.f32 %v1251, %v1392
        %v1394 = vpop.f32.mrf.mxu0
        %v1395 = vadd.f32 %v1256, %v1394
        %1396 = vmatmul.bf16.gmra.mxu0 %v1359
        %v1397 = vpop.f32.mrf.mxu0
        %v1398 = vadd.f32 %v1261, %v1397
        %v1399 = vpop.f32.mrf.mxu0
        %v1400 = vadd.f32 %v1266, %v1399
        %1401 = vmatmul.bf16.gmra.mxu0 %v1362
        %v1402 = vpop.f32.mrf.mxu0
        %v1403 = vadd.f32 %v1271, %v1402
        %v1404 = vpop.f32.mrf.mxu0
        %v1405 = vadd.f32 %v1276, %v1404
        %1406 = vmatmul.bf16.gmra.mxu0 %v1365
        %v1407 = vpop.f32.mrf.mxu0
        %v1408 = vadd.f32 %v1281, %v1407
        %v1409 = vpop.f32.mrf.mxu0
        %v1410 = vadd.f32 %v1286, %v1409
        %1411 = vmatmul.bf16.gmra.mxu0 %v1368
        %v1412 = vpop.f32.mrf.mxu0
        %v1413 = vadd.f32 %v1291, %v1412
        %v1414 = vpop.f32.mrf.mxu0
        %v1415 = vadd.f32 %v1296, %v1414
        %1416 = vmatmul.bf16.gmra.mxu0 %v1371
        %v1417 = vpop.f32.mrf.mxu0
        %v1418 = vadd.f32 %v1301, %v1417
        %v1419 = vpop.f32.mrf.mxu0
        %v1420 = vadd.f32 %v1306, %v1419
        %1421 = vdwg.mxu0
        %1422 = vst [vmem:[%s483] sm:$0xff] %v1383
        %1423 = vst [vmem:[%s483 + $0x8] sm:$0xff] %v1385
        %1424 = vst [vmem:[%s483 + $0x10] sm:$0xff] %v1388
        %1425 = vst [vmem:[%s483 + $0x18] sm:$0xff] %v1390
        %1426 = vst [vmem:[%s483 + $0x20] sm:$0xff] %v1393
        %1427 = vst [vmem:[%s483 + $0x28] sm:$0xff] %v1395
        %1428 = vst [vmem:[%s483 + $0x30] sm:$0xff] %v1398
        %1429 = vst [vmem:[%s483 + $0x38] sm:$0xff] %v1400
        %1430 = vst [vmem:[%s483 + $0x40] sm:$0xff] %v1403
        %1431 = vst [vmem:[%s483 + $0x48] sm:$0xff] %v1405
        %1432 = vst [vmem:[%s483 + $0x50] sm:$0xff] %v1408
        %1433 = vst [vmem:[%s483 + $0x58] sm:$0xff] %v1410
        %1434 = vst [vmem:[%s483 + $0x60] sm:$0xff] %v1413
        %1435 = vst [vmem:[%s483 + $0x68] sm:$0xff] %v1415
        %1436 = vst [vmem:[%s483 + $0x70] sm:$0xff] %v1418
        %1437 = vst [vmem:[%s483 + $0x78] sm:$0xff] %v1420
        %s1438 = sand.u32 %s273, 1
        %s1439 = scalar_lea.sflag [#allocation7], %s1438
        %s1440 = sand.u32 %s273, 1
        %s1441 = smul.addr %s1440, 128
        %s1442 = scalar_lea.vmem [#allocation6], %s1441
        // Predicated region
        $region110: #{tpu_custom_call.1} parent=96 // pred_check
          %p1443 = pneg %p283
        $region111: #{tpu_custom_call.1} parent=96 // pred_check_branch
          %1445 = sbr.rel (%p1443) target = $region113
        $region112: #{tpu_custom_call.1} parent=96 // pred_region
          %1447 = vsyncadd %s1439, 0
          %s1448 = smul.addr %s33, 32
          %s1449 = sadd.s32 %s34, %s1448
          %s1450 = smul.addr %s1449, 8
          %s1451 = scalar_lea.hbm %s11, %s1450
          %s1452 = sshll.u32 %s1442, 4
          %s1453 = int_to_ptr.vmem [resolvable:$true] %s1452
          %s1454 = sshll.u32 %s1451, 4
          %s1455 = int_to_ptr.hbm [resolvable:$true] %s1454
          %1460 = dma.vmem_to_hbm [thread:$0]  %s1453, 2048, %s1455, %s1439, 128, 256, 8
        $region113: #{tpu_custom_call.1} parent=96 // pred_fallthru
          _
        // Predicated region
        $region114: #{tpu_custom_call.1} parent=96 // pred_check
          %p1461 = pneg %p309
        $region115: #{tpu_custom_call.1} parent=96 // pred_check_branch
          %1463 = sbr.rel (%p1461) target = $region117
        $region116: #{tpu_custom_call.1} parent=96 // pred_region
          %1465 = vsyncadd [#allocation9], 0
          %s1466 = smul.addr %s33, 4
          %s1467 = smul.addr %s1466, 8
          %s1468 = scalar_lea.hbm %s12, %s1467
          %s1469 = sshll.u32 [#allocation8], 4
          %s1470 = int_to_ptr.vmem [resolvable:$true] %s1469
          %s1471 = sshll.u32 %s1468, 4
          %s1472 = int_to_ptr.hbm [resolvable:$true] %s1471
          %1477 = dma.vmem_to_hbm [thread:$0]  %s1470, 512, %s1472, [#allocation9], 128, 128, 8
        $region117: #{tpu_custom_call.1} parent=96 // pred_fallthru
          _
        // Predicated region
        $region118: #{tpu_custom_call.1} parent=96 // pred_check
          %p1478 = pneg %p309
        $region119: #{tpu_custom_call.1} parent=96 // pred_check_branch
          %1480 = sbr.rel (%p1478) target = $region121
        $region120: #{tpu_custom_call.1} parent=96 // pred_region
          %1482 = dma.done [#allocation9], 512
        $region121: #{tpu_custom_call.1} parent=96 // pred_fallthru
          _
      $region97: #{tpu_custom_call.1} parent=5 // pred_fallthru
        _
      %p1483 = scmp.le.s32.totalorder 2, %s24
      // Predicated region
      $region122: #{tpu_custom_call.1} parent=5 // pred_check
        %p1484 = pneg %p1483
      $region123: #{tpu_custom_call.1} parent=5 // pred_check_branch
        %1486 = sbr.rel (%p1484) target = $region125
      $region124: #{tpu_custom_call.1} parent=5 // pred_region
        %s1487 = ssub.s32 %s24, 2
        // Predicated region
        $region126: #{tpu_custom_call.1} parent=124 // pred_check
          %p1488 = pneg %p289
        $region127: #{tpu_custom_call.1} parent=124 // pred_check_branch
          %1490 = sbr.rel (%p1488) target = $region129
        $region128: #{tpu_custom_call.1} parent=124 // pred_region
          %s1491 = sand.u32 %s274, 1
          %s1492 = scalar_lea.sflag [#allocation7], %s1491
          %s1493 = sand.u32 %s274, 1
          %s1494 = smul.addr %s1493, 128
          %s1495 = scalar_lea.vmem [#allocation6], %s1494
          %1497 = dma.done %s1492, 2048
        $region129: #{tpu_custom_call.1} parent=124 // pred_fallthru
          _
      $region125: #{tpu_custom_call.1} parent=5 // pred_fallthru
        _
    $region6: #{tpu_custom_call.1} parent=1 // loop_footer
      %s28 = sadd.s32 1, %s24
    $region7: #{tpu_custom_call.1} parent=1 // loop_footer_branch
      %23 = sbr.rel target = $region3
    $region8: #{tpu_custom_call.1} parent=1 // loop_exit
      _
    %1498 = vsyncpa [#allocation7], 1
    %s1499 = scalar_lea.sflag [#allocation7], 1
    %1500 = vsyncpa %s1499, 1
    %1501 = vsyncpa [#allocation9], 1

</llo_original>
